<compile_context>
chip_gen: v5e
topology: v5e:2x2
jax: 0.10.0
libtpu: 0.0.40
codegen_flags: <defaults>
</compile_context>

<pallas_src>
import functools

import jax
import jax.numpy as jnp
import numpy as np
from jax import lax
from jax.experimental import pallas as pl
from jax.experimental.pallas import tpu as pltpu


LANE = 128          # TPU lane width (last-dim tile)
SUBLANE = 8         # TPU sublane width (second-to-last-dim tile)


def _round_up(x, m):
    return (x + m - 1) // m * m


# ----------------------------------------------------------------------------
# VMEM budgeting helpers (feedback: explicit vmem_limit + budget-driven chunk).
# ----------------------------------------------------------------------------
def _pick_t_chunk(S, B, G, Hp, stream_bytes, budget_bytes=16 << 20):
    """Largest chunk whose double-buffered streaming blocks fit the budget."""
    sub_b = _round_up(B, SUBLANE)
    per_t = (2 * 2 * sub_b * G * stream_bytes        # proj fwd+bwd blocks
             + 2 * 2 * sub_b * Hp * stream_bytes     # out fwd+bwd blocks
             + 2 * 2 * sub_b * LANE * 4)             # mask blocks (lane-padded)
    # cap so the (fully) unrolled inner loop stays reasonable
    return int(max(1, min(S, budget_bytes // per_t, 64)))


def _vmem_limit_bytes(t_chunk, B, G, Hp, stream_bytes):
    sub_b = _round_up(B, SUBLANE)
    need = 0
    need += 2 * 2 * t_chunk * sub_b * G * stream_bytes    # proj blocks, double-buf
    need += 2 * 2 * t_chunk * sub_b * LANE * 4            # mask blocks, double-buf
    need += 2 * SUBLANE * G * 4                           # bias, double-buf
    need += 2 * 2 * t_chunk * sub_b * Hp * stream_bytes   # out blocks, double-buf
    need += 2 * Hp * G * stream_bytes                     # resident W_hh (single-buf)
    need += 4 * sub_b * Hp * 4                            # h/c carries
    need = int(need * 1.5) + (2 << 20)                    # compiler headroom
    return int(max(32 << 20, min(need, 64 << 20)))        # cap at v7x physical VMEM


# ----------------------------------------------------------------------------
# Pallas kernel: one time-chunk of the FUSED bidirectional LSTM recurrence.
# grid = (num_chunks,) -- sequential ("arbitrary").  Each grid step walks
#   fwd :  local t = 0 .. t_chunk-1  of forward chunk  c
#   bwd :  local t = t_chunk-1 .. 0  of backward chunk num_chunks-1-c
# back-to-back, so the two independent dependency chains hide each other's
# MXU / EUP latency.  Only h_{t-1} @ W_hh (+ gates) is on the serial path;
# x @ W_ih (+ nothing) arrives precomputed in `pf/pb`.
# ----------------------------------------------------------------------------
def _bilstm_chunk_kernel(pf_ref, pb_ref, mf_ref, mb_ref, whh_hbm_ref, b_ref,
                         of_ref, ob_ref,
                         whh_ref, hf_ref, cf_ref, hb_ref, cb_ref,
                         *, hidden_size, t_chunk, unroll):
    chunk = pl.program_id(0)
    H = hidden_size

    @pl.when(chunk == 0)
    def _():
        # Single-buffered resident W_hh: one DMA per layer (instead of a
        # default double-buffered BlockSpec footprint).
        pltpu.sync_copy(whh_hbm_ref, whh_ref)
        hf_ref[...] = jnp.zeros_like(hf_ref)
        cf_ref[...] = jnp.zeros_like(cf_ref)
        hb_ref[...] = jnp.zeros_like(hb_ref)
        cb_ref[...] = jnp.zeros_like(cb_ref)

    w_f = whh_ref[0]                          # (Hp, 4Hp) VMEM-resident
    w_b = whh_ref[1]
    bias = b_ref[...].astype(jnp.float32)     # (2, 4Hp)
    b_f = bias[0:1]                           # (1, 4Hp)
    b_b = bias[1:2]

    def sig(x):
        # one EUP push (tanh) per gate instead of exp + reciprocal
        return 0.5 * jnp.tanh(0.5 * x) + 0.5

    def cell(pre, b, w, m, h, c):
        # element-wise math in f32; the dot runs at the stream dtype
        # (bf16 on v6e/v7x) with an f32 MXU accumulator.
        gates = (pre.astype(jnp.float32)
                 + jnp.dot(h.astype(w.dtype), w,
                           preferred_element_type=jnp.float32)
                 + b)
        # H is a multiple of 128 -> lane-tile-aligned gate slices.
        i = sig(gates[:, 0 * H:1 * H])
        f = sig(gates[:, 1 * H:2 * H])
        g = jnp.tanh(gates[:, 2 * H:3 * H])
        o = sig(gates[:, 3 * H:4 * H])
        c_pre = f * c + i * g
        h_new = (o * jnp.tanh(c_pre)) * m     # mask zeroes state at padding
        c_new = c_pre * m
        return h_new, c_new

    def step(tt, carry):
        hf, cf, hb, cb = carry
        # forward chain: local time tt (global t = chunk * t_chunk + tt)
        # TODO(synk): the per-step (B,1) mask vld could be hoisted to one
        # per-chunk block load once value dynamic-slice lowering is verified;
        # it is off the serial MXU/EUP path.
        hf, cf = cell(pf_ref[0, tt], b_f, w_f, mf_ref[tt], hf, cf)
        of_ref[tt] = hf.astype(of_ref.dtype)
        # backward chain: mirrored local time within its (reversed) chunk
        rt = t_chunk - 1 - tt
        hb, cb = cell(pb_ref[0, rt], b_b, w_b, mb_ref[rt], hb, cb)
        ob_ref[rt] = hb.astype(ob_ref.dtype)
        return hf, cf, hb, cb

    hf, cf, hb, cb = lax.fori_loop(
        0, t_chunk, step,
        (hf_ref[...], cf_ref[...], hb_ref[...], cb_ref[...]),
        unroll=unroll)
    hf_ref[...] = hf
    cf_ref[...] = cf
    hb_ref[...] = hb
    cb_ref[...] = cb


def bilstm_layer(proj_zsbg, masks_sb1, w_hh, bias, *, t_chunk, unroll):
    """Fused bidirectional recurrence for one layer.

    proj_zsbg : (2, S, B, 4Hp) precomputed x @ W_ih (no bias) for fwd / bwd
    masks_sb1 : (S, B, 1) float32 mask (1 = real token, 0 = padding)
    w_hh      : (2, Hp, 4Hp) hidden->gates weights (gate order i, f, g, o)
    bias      : (2, 4Hp) float32 combined bias
    returns (h_fwd, h_bwd), each (S, B, Hp), in original time order.
    """
    _, S, B, G = proj_zsbg.shape
    Hp = G // 4
    assert S % t_chunk == 0
    num_chunks = S // t_chunk
    stream_dtype = proj_zsbg.dtype
    stream_bytes = jnp.dtype(stream_dtype).itemsize

    kernel = functools.partial(_bilstm_chunk_kernel, hidden_size=Hp,
                               t_chunk=t_chunk, unroll=unroll)
    vmem_limit = _vmem_limit_bytes(t_chunk, B, G, Hp, stream_bytes)

    out_f, out_b = pl.pallas_call(
        kernel,
        out_shape=(jax.ShapeDtypeStruct((S, B, Hp), stream_dtype),
                   jax.ShapeDtypeStruct((S, B, Hp), stream_dtype)),
        grid_spec=pltpu.PrefetchScalarGridSpec(
            num_scalar_prefetch=0,
            grid=(num_chunks,),
            in_specs=[
                # fwd / bwd pre-activation chunks (same array, two windows)
                pl.BlockSpec((1, t_chunk, B, G), lambda c: (0, c, 0, 0)),
                pl.BlockSpec((1, t_chunk, B, G),
                             lambda c: (1, num_chunks - 1 - c, 0, 0)),
                # fwd / bwd mask chunks
                pl.BlockSpec((t_chunk, B, 1), lambda c: (c, 0, 0)),
                pl.BlockSpec((t_chunk, B, 1),
                             lambda c: (num_chunks - 1 - c, 0, 0)),
                # W_hh stays in HBM; copied once into single-buffered VMEM
                pl.BlockSpec(memory_space=pl.ANY),
                # bias (both directions), tiny, resident
                pl.BlockSpec((2, G), lambda c: (0, 0)),
            ],
            out_specs=[
                pl.BlockSpec((t_chunk, B, Hp), lambda c: (c, 0, 0)),
                pl.BlockSpec((t_chunk, B, Hp),
                             lambda c: (num_chunks - 1 - c, 0, 0)),
            ],
            scratch_shapes=[
                pltpu.VMEM((2, Hp, G), stream_dtype),   # resident W_hh
                pltpu.VMEM((B, Hp), jnp.float32),       # h fwd
                pltpu.VMEM((B, Hp), jnp.float32),       # c fwd
                pltpu.VMEM((B, Hp), jnp.float32),       # h bwd
                pltpu.VMEM((B, Hp), jnp.float32),       # c bwd
            ],
        ),
        compiler_params=pltpu.CompilerParams(
            # single grid axis carries both recurrences -> sequential
            dimension_semantics=("arbitrary",),
            vmem_limit_bytes=vmem_limit),
    )(proj_zsbg, proj_zsbg, masks_sb1, masks_sb1, w_hh, bias)
    return out_f, out_b


# ----------------------------------------------------------------------------
# Parameter preparation: pad hidden channels H -> Hp (lane multiple) and cast.
# ----------------------------------------------------------------------------
def _pad_gate_dim(a, H, Hp):
    """(..., 4H) -> (..., 4Hp) with each of the i/f/g/o blocks zero-padded."""
    if Hp == H:
        return a
    lead = a.shape[:-1]
    a = a.reshape(lead + (4, H))
    pad = [(0, 0)] * len(lead) + [(0, 0), (0, Hp - H)]
    return jnp.pad(a, pad).reshape(lead + (4 * Hp,))


def _prepare_layer(layer, H, Hp, stream_dtype, first):
    w_ih = _pad_gate_dim(layer["w_ih"], H, Hp)            # (2, d_in, 4Hp)
    if not first:
        # input dim is [h_fwd(H) ; h_bwd(H)]: split halves, pad each to Hp
        w_ih = w_ih.reshape(2, 2, H, 4 * Hp)
        w_ih = jnp.pad(w_ih, ((0, 0), (0, 0), (0, Hp - H), (0, 0)))
    w_hh = _pad_gate_dim(layer["w_hh"], H, Hp)             # (2, H, 4Hp)
    w_hh = jnp.pad(w_hh, ((0, 0), (0, Hp - H), (0, 0)))    # (2, Hp, 4Hp)
    bias = _pad_gate_dim(layer["bias"], H, Hp)             # (2, 4Hp)
    return (w_ih.astype(stream_dtype), w_hh.astype(stream_dtype),
            bias.astype(jnp.float32))


# ----------------------------------------------------------------------------
# Encoder forward: multi-layer bidirectional masked LSTM + transpose(1, 0).
# ----------------------------------------------------------------------------
def encoder_forward(inputs_bsd, masks_bs, params, *, t_chunk=None,
                    stream_dtype=jnp.float32, unroll=True):
    """inputs_bsd: (B, S, D); masks_bs: (B, S).  Returns (B, S, 2H) float32."""
    B, S, _ = inputs_bsd.shape
    H = params[0]["w_hh"].shape[1]
    Hp = _round_up(H, LANE)            # lane-dense gate slices & output stores
    G = 4 * Hp
    stream_bytes = jnp.dtype(stream_dtype).itemsize

    if t_chunk is None:
        t_chunk = _pick_t_chunk(S, B, G, Hp, stream_bytes)
    t_chunk = int(max(1, min(t_chunk, S)))
    if not isinstance(unroll, bool):
        unroll = int(max(1, min(unroll, t_chunk)))

    S_pad = pl.cdiv(S, t_chunk) * t_chunk
    x = jnp.transpose(inputs_bsd, (1, 0, 2)).astype(jnp.float32)          # (S,B,D)
    m = jnp.transpose(masks_bs, (1, 0))[:, :, None].astype(jnp.float32)   # (S,B,1)
    if S_pad != S:
        # padded tail timesteps get mask 0 -> zero state/output, sliced below
        x = jnp.pad(x, ((0, S_pad - S), (0, 0), (0, 0)))
        m = jnp.pad(m, ((0, S_pad - S), (0, 0), (0, 0)))

    prev_f = prev_b = None
    for li, layer in enumerate(params):
        w_ih, w_hh, bias = _prepare_layer(layer, H, Hp, stream_dtype,
                                          first=(li == 0))
        # Hoisted input projection: one chunk-parallel GEMM over all timesteps
        # & both directions.  Bias is added in-kernel (no extra HBM pass).
        if li == 0:
            proj = jnp.einsum('sbd,zdg->zsbg', x.astype(stream_dtype), w_ih,
                              preferred_element_type=jnp.float32)
        else:
            # [h_fwd || h_bwd] @ W_ih without materializing the concatenation
            proj = (jnp.einsum('sbh,zhg->zsbg', prev_f, w_ih[:, 0],
                               preferred_element_type=jnp.float32)
                    + jnp.einsum('sbh,zhg->zsbg', prev_b, w_ih[:, 1],
                                 preferred_element_type=jnp.float32))
        proj = proj.astype(stream_dtype)                   # (2, S_pad, B, 4Hp)

        prev_f, prev_b = bilstm_layer(proj, m, w_hh, bias,
                                      t_chunk=t_chunk, unroll=unroll)

    # (S_pad, B, Hp) x2 -> (B, S, 2H): equivalent to LSTM's (seq,batch,2H)
    # followed by hiddens.transpose_(1, 0)
    out = jnp.concatenate([prev_f[:S, :, :H], prev_b[:S, :, :H]], axis=-1)
    return jnp.transpose(out, (1, 0, 2)).astype(jnp.float32)


# ----------------------------------------------------------------------------
# Pure-JAX reference (lax.scan) for correctness checks.
# ----------------------------------------------------------------------------
def _ref_direction(x_tbd, m_tb1, w_ih, w_hh, bias, reverse):
    H = w_hh.shape[0]
    xs = (x_tbd, m_tb1)
    if reverse:
        xs = (x_tbd[::-1], m_tb1[::-1])

    def step(carry, inp):
        h, c = carry
        xt, mt = inp
        gates = xt @ w_ih + h @ w_hh + bias
        i = jax.nn.sigmoid(gates[:, 0 * H:1 * H])
        f = jax.nn.sigmoid(gates[:, 1 * H:2 * H])
        g = jnp.tanh(gates[:, 2 * H:3 * H])
        o = jax.nn.sigmoid(gates[:, 3 * H:4 * H])
        c_pre = f * c + i * g
        c_new = c_pre * mt
        h_new = (o * jnp.tanh(c_pre)) * mt
        return (h_new, c_new), h_new

    B = x_tbd.shape[1]
    init = (jnp.zeros((B, H), jnp.float32), jnp.zeros((B, H), jnp.float32))
    _, hs = lax.scan(step, init, xs)
    if reverse:
        hs = hs[::-1]
    return hs


def encoder_reference(inputs_bsd, masks_bs, params):
    x = jnp.transpose(inputs_bsd, (1, 0, 2)).astype(jnp.float32)
    m = jnp.transpose(masks_bs, (1, 0))[:, :, None].astype(jnp.float32)
    for layer in params:
        h_fwd = _ref_direction(x, m, layer["w_ih"][0], layer["w_hh"][0],
                               layer["bias"][0][None, :], reverse=False)
        h_bwd = _ref_direction(x, m, layer["w_ih"][1], layer["w_hh"][1],
                               layer["bias"][1][None, :], reverse=True)
        x = jnp.concatenate([h_fwd, h_bwd], axis=-1)
    return jnp.transpose(x, (1, 0, 2))


# ----------------------------------------------------------------------------
# Deterministic parameter construction (mirrors nn.LSTM shapes; gate order
# i, f, g, o; weights stored transposed as (in, 4H); directions stacked).
# ----------------------------------------------------------------------------
def init_params(key, input_size, hidden_size, num_layers):
    params = []
    bound = 1.0 / np.sqrt(hidden_size)
    for layer in range(num_layers):
        d_in = input_size if layer == 0 else 2 * hidden_size
        key, k1, k2, k3, k4 = jax.random.split(key, 5)
        w_ih = jax.random.uniform(k1, (2, d_in, 4 * hidden_size),
                                  jnp.float32, -bound, bound)
        w_hh = jax.random.uniform(k2, (2, hidden_size, 4 * hidden_size),
                                  jnp.float32, -bound, bound)
        b_ih = jax.random.uniform(k3, (2, 4 * hidden_size),
                                  jnp.float32, -bound, bound)
        b_hh = jax.random.uniform(k4, (2, 4 * hidden_size),
                                  jnp.float32, -bound, bound)
        params.append({"w_ih": w_ih, "w_hh": w_hh, "bias": b_ih + b_hh})
    return params


if __name__ == "__main__":
    # Small shapes consistent with the module (word-level encoder).
    B, S = 2, 10              # batch, sequence length (exercises chunk padding)
    INPUT_SIZE = 32           # word embedding dim
    HIDDEN = 32               # config.word_hidden_size
    NUM_LAYERS = 2            # config.word_num_layers
    T_CHUNK = 4               # timesteps per grid step (S padded to 12 -> 3 chunks)

    key = jax.random.PRNGKey(0)
    k_x, k_p = jax.random.split(key)

    inputs = jax.random.normal(k_x, (B, S, INPUT_SIZE), jnp.float32)
    # deterministic masks: first sequence full length, second padded after 6.
    lengths = jnp.array([S, 6], dtype=jnp.int32)
    masks = (jnp.arange(S)[None, :] < lengths[:, None]).astype(jnp.float32)

    params = init_params(k_p, INPUT_SIZE, HIDDEN, NUM_LAYERS)

    ref = jax.block_until_ready(encoder_reference(inputs, masks, params))

    fwd = jax.jit(encoder_forward,
                  static_argnames=("t_chunk", "stream_dtype", "unroll"))

    # f32 streams: tight check against the lax.scan reference.
    out = jax.block_until_ready(fwd(inputs, masks, params, t_chunk=T_CHUNK))
    assert out.shape == (B, S, 2 * HIDDEN), out.shape
    np.testing.assert_allclose(np.asarray(out), np.asarray(ref),
                               rtol=1e-4, atol=1e-4)

    # bf16 streams (halved HBM traffic, native bf16 MXU rate on v6e/v7x),
    # auto-picked t_chunk; checked against the f32 reference with loose tol.
    out_bf16 = jax.block_until_ready(
        fwd(inputs, masks, params, t_chunk=None, stream_dtype=jnp.bfloat16))
    assert out_bf16.shape == (B, S, 2 * HIDDEN), out_bf16.shape
    np.testing.assert_allclose(np.asarray(out_bf16), np.asarray(ref),
                               rtol=0.1, atol=0.1)

    print("KERNEL_OK")
</pallas_src>

<mosaic_0001>
module attributes {stable_mosaic.version = 11 : i64} {
  func.func @_bilstm_chunk_kernel(%arg0: i32, %arg1: memref<1x4x2x512xf32, #tpu.memory_space<vmem>>, %arg2: memref<1x4x2x512xf32, #tpu.memory_space<vmem>>, %arg3: memref<4x2x1xf32, #tpu.memory_space<vmem>>, %arg4: memref<4x2x1xf32, #tpu.memory_space<vmem>>, %arg5: memref<2x128x512xf32, #tpu.memory_space<any>>, %arg6: memref<2x512xf32, #tpu.memory_space<vmem>>, %arg7: memref<4x2x128xf32, #tpu.memory_space<vmem>>, %arg8: memref<4x2x128xf32, #tpu.memory_space<vmem>>, %arg9: memref<2x128x512xf32, #tpu.memory_space<vmem>>, %arg10: memref<2x128xf32, #tpu.memory_space<vmem>>, %arg11: memref<2x128xf32, #tpu.memory_space<vmem>>, %arg12: memref<2x128xf32, #tpu.memory_space<vmem>>, %arg13: memref<2x128xf32, #tpu.memory_space<vmem>>) attributes {dimension_semantics = [#tpu.dimension_semantics<arbitrary>], iteration_bounds = array<i64: 3>, scalar_prefetch = 0 : i64, scratch_operands = 5 : i64, tpu.core_type = #tpu.core_type<tc>, window_params = [{transform_indices = @transform_0, window_bounds = array<i64: 1, 4, 2, 512>}, {transform_indices = @transform_1, window_bounds = array<i64: 1, 4, 2, 512>}, {transform_indices = @transform_2, window_bounds = array<i64: 4, 2, 1>}, {transform_indices = @transform_3, window_bounds = array<i64: 4, 2, 1>}, {}, {pipeline_mode = #tpu.pipeline_mode<synchronous>, transform_indices = @transform_5, window_bounds = array<i64: 2, 512>}, {transform_indices = @transform_6, window_bounds = array<i64: 4, 2, 128>}, {transform_indices = @transform_7, window_bounds = array<i64: 4, 2, 128>}]} {
    %c0_i32 = arith.constant 0 : i32
    %0 = arith.cmpi eq, %arg0, %c0_i32 : i32
    %1 = arith.extui %0 : i1 to i32
    %c0_i32_0 = arith.constant 0 : i32
    %2 = arith.cmpi ne, %1, %c0_i32_0 : i32
    scf.if %2 {
      "tpu.region"() ({
        %422 = tpu.sem_alloc : memref<!tpu.dma_semaphore, #tpu.memory_space<semaphore_mem>>
        tpu.enqueue_dma source(%arg5 : memref<2x128x512xf32, #tpu.memory_space<any>>) target(%arg9 : memref<2x128x512xf32, #tpu.memory_space<vmem>>) target_semaphore(%422 : memref<!tpu.dma_semaphore, #tpu.memory_space<semaphore_mem>>)
        tpu.wait_dma2 semaphore(%422 : memref<!tpu.dma_semaphore, #tpu.memory_space<semaphore_mem>>) src(%arg5 : memref<2x128x512xf32, #tpu.memory_space<any>>) dst(%arg9 : memref<2x128x512xf32, #tpu.memory_space<vmem>>)
        tpu.yield
      }) : () -> ()
      %cst_163 = arith.constant 0.000000e+00 : f32
      %414 = vector.broadcast %cst_163 : f32 to vector<2x128xf32>
      %c0_164 = arith.constant 0 : index
      %c0_165 = arith.constant 0 : index
      %415 = vector.load %arg10[%c0_164, %c0_165] : memref<2x128xf32, #tpu.memory_space<vmem>>, vector<2x128xf32>
      tpu.vector_store %arg10[%c0_164, %c0_165], %414 {strides = array<i32>} : memref<2x128xf32, #tpu.memory_space<vmem>>, vector<2x128xf32>,
      %cst_166 = arith.constant 0.000000e+00 : f32
      %416 = vector.broadcast %cst_166 : f32 to vector<2x128xf32>
      %c0_167 = arith.constant 0 : index
      %c0_168 = arith.constant 0 : index
      %417 = vector.load %arg11[%c0_167, %c0_168] : memref<2x128xf32, #tpu.memory_space<vmem>>, vector<2x128xf32>
      tpu.vector_store %arg11[%c0_167, %c0_168], %416 {strides = array<i32>} : memref<2x128xf32, #tpu.memory_space<vmem>>, vector<2x128xf32>,
      %cst_169 = arith.constant 0.000000e+00 : f32
      %418 = vector.broadcast %cst_169 : f32 to vector<2x128xf32>
      %c0_170 = arith.constant 0 : index
      %c0_171 = arith.constant 0 : index
      %419 = vector.load %arg12[%c0_170, %c0_171] : memref<2x128xf32, #tpu.memory_space<vmem>>, vector<2x128xf32>
      tpu.vector_store %arg12[%c0_170, %c0_171], %418 {strides = array<i32>} : memref<2x128xf32, #tpu.memory_space<vmem>>, vector<2x128xf32>,
      %cst_172 = arith.constant 0.000000e+00 : f32
      %420 = vector.broadcast %cst_172 : f32 to vector<2x128xf32>
      %c0_173 = arith.constant 0 : index
      %c0_174 = arith.constant 0 : index
      %421 = vector.load %arg13[%c0_173, %c0_174] : memref<2x128xf32, #tpu.memory_space<vmem>>, vector<2x128xf32>
      tpu.vector_store %arg13[%c0_173, %c0_174], %420 {strides = array<i32>} : memref<2x128xf32, #tpu.memory_space<vmem>>, vector<2x128xf32>,
    } else {
    }
    %c0 = arith.constant 0 : index
    %c0_1 = arith.constant 0 : index
    %c0_2 = arith.constant 0 : index
    %3 = vector.load %arg9[%c0, %c0_1, %c0_2] : memref<2x128x512xf32, #tpu.memory_space<vmem>>, vector<1x128x512xf32>
    %4 = vector.shape_cast %3 : vector<1x128x512xf32> to vector<128x512xf32>
    %c1 = arith.constant 1 : index
    %c0_3 = arith.constant 0 : index
    %c0_4 = arith.constant 0 : index
    %5 = vector.load %arg9[%c1, %c0_3, %c0_4] : memref<2x128x512xf32, #tpu.memory_space<vmem>>, vector<1x128x512xf32>
    %6 = vector.shape_cast %5 : vector<1x128x512xf32> to vector<128x512xf32>
    %c0_5 = arith.constant 0 : index
    %c0_6 = arith.constant 0 : index
    %7 = vector.load %arg6[%c0_5, %c0_6] : memref<2x512xf32, #tpu.memory_space<vmem>>, vector<2x512xf32>
    %8 = vector.extract_strided_slice %7 {offsets = [0, 0], sizes = [1, 512], strides = [1, 1]} : vector<2x512xf32> to vector<1x512xf32>
    %9 = vector.extract_strided_slice %7 {offsets = [1, 0], sizes = [1, 512], strides = [1, 1]} : vector<2x512xf32> to vector<1x512xf32>
    %c0_7 = arith.constant 0 : index
    %c0_8 = arith.constant 0 : index
    %10 = vector.load %arg10[%c0_7, %c0_8] : memref<2x128xf32, #tpu.memory_space<vmem>>, vector<2x128xf32>
    %c0_9 = arith.constant 0 : index
    %c0_10 = arith.constant 0 : index
    %11 = vector.load %arg11[%c0_9, %c0_10] : memref<2x128xf32, #tpu.memory_space<vmem>>, vector<2x128xf32>
    %c0_11 = arith.constant 0 : index
    %c0_12 = arith.constant 0 : index
    %12 = vector.load %arg12[%c0_11, %c0_12] : memref<2x128xf32, #tpu.memory_space<vmem>>, vector<2x128xf32>
    %c0_13 = arith.constant 0 : index
    %c0_14 = arith.constant 0 : index
    %13 = vector.load %arg13[%c0_13, %c0_14] : memref<2x128xf32, #tpu.memory_space<vmem>>, vector<2x128xf32>
    %c0_i32_15 = arith.constant 0 : i32
    %c0_16 = arith.constant 0 : index
    %14 = arith.index_cast %c0_i32_15 : i32 to index
    %c0_17 = arith.constant 0 : index
    %c0_18 = arith.constant 0 : index
    %15 = vector.load %arg1[%c0_16, %14, %c0_17, %c0_18] : memref<1x4x2x512xf32, #tpu.memory_space<vmem>>, vector<1x1x2x512xf32>
    %16 = vector.shape_cast %15 : vector<1x1x2x512xf32> to vector<2x512xf32>
    %17 = arith.index_cast %c0_i32_15 : i32 to index
    %c0_19 = arith.constant 0 : index
    %c0_20 = arith.constant 0 : index
    %18 = vector.load %arg3[%17, %c0_19, %c0_20] : memref<4x2x1xf32, #tpu.memory_space<vmem>>, vector<1x2x1xf32>
    %19 = vector.shape_cast %18 : vector<1x2x1xf32> to vector<2x1xf32>
    %cst = arith.constant dense<0.000000e+00> : vector<2x512xf32>
    %20 = tpu.matmul %10, %4, %cst {dimension_numbers = #tpu.dot_dimension_numbers<[1], [0], [0], [1], [0, 0, 1, 1], [], []>} : vector<2x128xf32>, vector<128x512xf32>, vector<2x512xf32> -> vector<2x512xf32>
    %21 = arith.addf %16, %20 : vector<2x512xf32>
    %22 = vector.broadcast %8 : vector<1x512xf32> to vector<2x512xf32>
    %23 = arith.addf %21, %22 : vector<2x512xf32>
    %24 = vector.extract_strided_slice %23 {offsets = [0, 0], sizes = [2, 128], strides = [1, 1]} : vector<2x512xf32> to vector<2x128xf32>
    %cst_21 = arith.constant 5.000000e-01 : f32
    %25 = vector.broadcast %cst_21 : f32 to vector<2x128xf32>
    %26 = arith.mulf %25, %24 : vector<2x128xf32>
    %27 = math.tanh %26 : vector<2x128xf32>
    %cst_22 = arith.constant 5.000000e-01 : f32
    %28 = vector.broadcast %cst_22 : f32 to vector<2x128xf32>
    %29 = arith.mulf %28, %27 : vector<2x128xf32>
    %cst_23 = arith.constant 5.000000e-01 : f32
    %30 = vector.broadcast %cst_23 : f32 to vector<2x128xf32>
    %31 = arith.addf %29, %30 : vector<2x128xf32>
    %32 = vector.extract_strided_slice %23 {offsets = [0, 128], sizes = [2, 128], strides = [1, 1]} : vector<2x512xf32> to vector<2x128xf32>
    %cst_24 = arith.constant 5.000000e-01 : f32
    %33 = vector.broadcast %cst_24 : f32 to vector<2x128xf32>
    %34 = arith.mulf %33, %32 : vector<2x128xf32>
    %35 = math.tanh %34 : vector<2x128xf32>
    %cst_25 = arith.constant 5.000000e-01 : f32
    %36 = vector.broadcast %cst_25 : f32 to vector<2x128xf32>
    %37 = arith.mulf %36, %35 : vector<2x128xf32>
    %cst_26 = arith.constant 5.000000e-01 : f32
    %38 = vector.broadcast %cst_26 : f32 to vector<2x128xf32>
    %39 = arith.addf %37, %38 : vector<2x128xf32>
    %40 = vector.extract_strided_slice %23 {offsets = [0, 256], sizes = [2, 128], strides = [1, 1]} : vector<2x512xf32> to vector<2x128xf32>
    %41 = math.tanh %40 : vector<2x128xf32>
    %42 = vector.extract_strided_slice %23 {offsets = [0, 384], sizes = [2, 128], strides = [1, 1]} : vector<2x512xf32> to vector<2x128xf32>
    %cst_27 = arith.constant 5.000000e-01 : f32
    %43 = vector.broadcast %cst_27 : f32 to vector<2x128xf32>
    %44 = arith.mulf %43, %42 : vector<2x128xf32>
    %45 = math.tanh %44 : vector<2x128xf32>
    %cst_28 = arith.constant 5.000000e-01 : f32
    %46 = vector.broadcast %cst_28 : f32 to vector<2x128xf32>
    %47 = arith.mulf %46, %45 : vector<2x128xf32>
    %cst_29 = arith.constant 5.000000e-01 : f32
    %48 = vector.broadcast %cst_29 : f32 to vector<2x128xf32>
    %49 = arith.addf %47, %48 : vector<2x128xf32>
    %50 = arith.mulf %39, %11 : vector<2x128xf32>
    %51 = arith.mulf %31, %41 : vector<2x128xf32>
    %52 = arith.addf %50, %51 : vector<2x128xf32>
    %53 = math.tanh %52 : vector<2x128xf32>
    %54 = arith.mulf %49, %53 : vector<2x128xf32>
    %55 = vector.broadcast %19 : vector<2x1xf32> to vector<2x128xf32>
    %56 = arith.mulf %54, %55 : vector<2x128xf32>
    %57 = vector.broadcast %19 : vector<2x1xf32> to vector<2x128xf32>
    %58 = arith.mulf %52, %57 : vector<2x128xf32>
    %59 = arith.index_cast %c0_i32_15 : i32 to index
    %c0_30 = arith.constant 0 : index
    %c0_31 = arith.constant 0 : index
    %60 = vector.load %arg7[%59, %c0_30, %c0_31] : memref<4x2x128xf32, #tpu.memory_space<vmem>>, vector<1x2x128xf32>
    %61 = vector.shape_cast %60 : vector<1x2x128xf32> to vector<2x128xf32>
    %62 = vector.shape_cast %56 : vector<2x128xf32> to vector<1x2x128xf32>
    tpu.vector_store %arg7[%59, %c0_30, %c0_31], %62 {strides = array<i32>} : memref<4x2x128xf32, #tpu.memory_space<vmem>>, vector<1x2x128xf32>,
    %c3_i32 = arith.constant 3 : i32
    %63 = arith.subi %c3_i32, %c0_i32_15 : i32
    %c0_32 = arith.constant 0 : index
    %64 = arith.index_cast %63 : i32 to index
    %c0_33 = arith.constant 0 : index
    %c0_34 = arith.constant 0 : index
    %65 = vector.load %arg2[%c0_32, %64, %c0_33, %c0_34] : memref<1x4x2x512xf32, #tpu.memory_space<vmem>>, vector<1x1x2x512xf32>
    %66 = vector.shape_cast %65 : vector<1x1x2x512xf32> to vector<2x512xf32>
    %67 = arith.index_cast %63 : i32 to index
    %c0_35 = arith.constant 0 : index
    %c0_36 = arith.constant 0 : index
    %68 = vector.load %arg4[%67, %c0_35, %c0_36] : memref<4x2x1xf32, #tpu.memory_space<vmem>>, vector<1x2x1xf32>
    %69 = vector.shape_cast %68 : vector<1x2x1xf32> to vector<2x1xf32>
    %cst_37 = arith.constant dense<0.000000e+00> : vector<2x512xf32>
    %70 = tpu.matmul %12, %6, %cst_37 {dimension_numbers = #tpu.dot_dimension_numbers<[1], [0], [0], [1], [0, 0, 1, 1], [], []>} : vector<2x128xf32>, vector<128x512xf32>, vector<2x512xf32> -> vector<2x512xf32>
    %71 = arith.addf %66, %70 : vector<2x512xf32>
    %72 = vector.broadcast %9 : vector<1x512xf32> to vector<2x512xf32>
    %73 = arith.addf %71, %72 : vector<2x512xf32>
    %74 = vector.extract_strided_slice %73 {offsets = [0, 0], sizes = [2, 128], strides = [1, 1]} : vector<2x512xf32> to vector<2x128xf32>
    %cst_38 = arith.constant 5.000000e-01 : f32
    %75 = vector.broadcast %cst_38 : f32 to vector<2x128xf32>
    %76 = arith.mulf %75, %74 : vector<2x128xf32>
    %77 = math.tanh %76 : vector<2x128xf32>
    %cst_39 = arith.constant 5.000000e-01 : f32
    %78 = vector.broadcast %cst_39 : f32 to vector<2x128xf32>
    %79 = arith.mulf %78, %77 : vector<2x128xf32>
    %cst_40 = arith.constant 5.000000e-01 : f32
    %80 = vector.broadcast %cst_40 : f32 to vector<2x128xf32>
    %81 = arith.addf %79, %80 : vector<2x128xf32>
    %82 = vector.extract_strided_slice %73 {offsets = [0, 128], sizes = [2, 128], strides = [1, 1]} : vector<2x512xf32> to vector<2x128xf32>
    %cst_41 = arith.constant 5.000000e-01 : f32
    %83 = vector.broadcast %cst_41 : f32 to vector<2x128xf32>
    %84 = arith.mulf %83, %82 : vector<2x128xf32>
    %85 = math.tanh %84 : vector<2x128xf32>
    %cst_42 = arith.constant 5.000000e-01 : f32
    %86 = vector.broadcast %cst_42 : f32 to vector<2x128xf32>
    %87 = arith.mulf %86, %85 : vector<2x128xf32>
    %cst_43 = arith.constant 5.000000e-01 : f32
    %88 = vector.broadcast %cst_43 : f32 to vector<2x128xf32>
    %89 = arith.addf %87, %88 : vector<2x128xf32>
    %90 = vector.extract_strided_slice %73 {offsets = [0, 256], sizes = [2, 128], strides = [1, 1]} : vector<2x512xf32> to vector<2x128xf32>
    %91 = math.tanh %90 : vector<2x128xf32>
    %92 = vector.extract_strided_slice %73 {offsets = [0, 384], sizes = [2, 128], strides = [1, 1]} : vector<2x512xf32> to vector<2x128xf32>
    %cst_44 = arith.constant 5.000000e-01 : f32
    %93 = vector.broadcast %cst_44 : f32 to vector<2x128xf32>
    %94 = arith.mulf %93, %92 : vector<2x128xf32>
    %95 = math.tanh %94 : vector<2x128xf32>
    %cst_45 = arith.constant 5.000000e-01 : f32
    %96 = vector.broadcast %cst_45 : f32 to vector<2x128xf32>
    %97 = arith.mulf %96, %95 : vector<2x128xf32>
    %cst_46 = arith.constant 5.000000e-01 : f32
    %98 = vector.broadcast %cst_46 : f32 to vector<2x128xf32>
    %99 = arith.addf %97, %98 : vector<2x128xf32>
    %100 = arith.mulf %89, %13 : vector<2x128xf32>
    %101 = arith.mulf %81, %91 : vector<2x128xf32>
    %102 = arith.addf %100, %101 : vector<2x128xf32>
    %103 = math.tanh %102 : vector<2x128xf32>
    %104 = arith.mulf %99, %103 : vector<2x128xf32>
    %105 = vector.broadcast %69 : vector<2x1xf32> to vector<2x128xf32>
    %106 = arith.mulf %104, %105 : vector<2x128xf32>
    %107 = vector.broadcast %69 : vector<2x1xf32> to vector<2x128xf32>
    %108 = arith.mulf %102, %107 : vector<2x128xf32>
    %109 = arith.index_cast %63 : i32 to index
    %c0_47 = arith.constant 0 : index
    %c0_48 = arith.constant 0 : index
    %110 = vector.load %arg8[%109, %c0_47, %c0_48] : memref<4x2x128xf32, #tpu.memory_space<vmem>>, vector<1x2x128xf32>
    %111 = vector.shape_cast %110 : vector<1x2x128xf32> to vector<2x128xf32>
    %112 = vector.shape_cast %106 : vector<2x128xf32> to vector<1x2x128xf32>
    tpu.vector_store %arg8[%109, %c0_47, %c0_48], %112 {strides = array<i32>} : memref<4x2x128xf32, #tpu.memory_space<vmem>>, vector<1x2x128xf32>,
    %c1_i32 = arith.constant 1 : i32
    %c0_49 = arith.constant 0 : index
    %113 = arith.index_cast %c1_i32 : i32 to index
    %c0_50 = arith.constant 0 : index
    %c0_51 = arith.constant 0 : index
    %114 = vector.load %arg1[%c0_49, %113, %c0_50, %c0_51] : memref<1x4x2x512xf32, #tpu.memory_space<vmem>>, vector<1x1x2x512xf32>
    %115 = vector.shape_cast %114 : vector<1x1x2x512xf32> to vector<2x512xf32>
    %116 = arith.index_cast %c1_i32 : i32 to index
    %c0_52 = arith.constant 0 : index
    %c0_53 = arith.constant 0 : index
    %117 = vector.load %arg3[%116, %c0_52, %c0_53] : memref<4x2x1xf32, #tpu.memory_space<vmem>>, vector<1x2x1xf32>
    %118 = vector.shape_cast %117 : vector<1x2x1xf32> to vector<2x1xf32>
    %cst_54 = arith.constant dense<0.000000e+00> : vector<2x512xf32>
    %119 = tpu.matmul %56, %4, %cst_54 {dimension_numbers = #tpu.dot_dimension_numbers<[1], [0], [0], [1], [0, 0, 1, 1], [], []>} : vector<2x128xf32>, vector<128x512xf32>, vector<2x512xf32> -> vector<2x512xf32>
    %120 = arith.addf %115, %119 : vector<2x512xf32>
    %121 = vector.broadcast %8 : vector<1x512xf32> to vector<2x512xf32>
    %122 = arith.addf %120, %121 : vector<2x512xf32>
    %123 = vector.extract_strided_slice %122 {offsets = [0, 0], sizes = [2, 128], strides = [1, 1]} : vector<2x512xf32> to vector<2x128xf32>
    %cst_55 = arith.constant 5.000000e-01 : f32
    %124 = vector.broadcast %cst_55 : f32 to vector<2x128xf32>
    %125 = arith.mulf %124, %123 : vector<2x128xf32>
    %126 = math.tanh %125 : vector<2x128xf32>
    %cst_56 = arith.constant 5.000000e-01 : f32
    %127 = vector.broadcast %cst_56 : f32 to vector<2x128xf32>
    %128 = arith.mulf %127, %126 : vector<2x128xf32>
    %cst_57 = arith.constant 5.000000e-01 : f32
    %129 = vector.broadcast %cst_57 : f32 to vector<2x128xf32>
    %130 = arith.addf %128, %129 : vector<2x128xf32>
    %131 = vector.extract_strided_slice %122 {offsets = [0, 128], sizes = [2, 128], strides = [1, 1]} : vector<2x512xf32> to vector<2x128xf32>
    %cst_58 = arith.constant 5.000000e-01 : f32
    %132 = vector.broadcast %cst_58 : f32 to vector<2x128xf32>
    %133 = arith.mulf %132, %131 : vector<2x128xf32>
    %134 = math.tanh %133 : vector<2x128xf32>
    %cst_59 = arith.constant 5.000000e-01 : f32
    %135 = vector.broadcast %cst_59 : f32 to vector<2x128xf32>
    %136 = arith.mulf %135, %134 : vector<2x128xf32>
    %cst_60 = arith.constant 5.000000e-01 : f32
    %137 = vector.broadcast %cst_60 : f32 to vector<2x128xf32>
    %138 = arith.addf %136, %137 : vector<2x128xf32>
    %139 = vector.extract_strided_slice %122 {offsets = [0, 256], sizes = [2, 128], strides = [1, 1]} : vector<2x512xf32> to vector<2x128xf32>
    %140 = math.tanh %139 : vector<2x128xf32>
    %141 = vector.extract_strided_slice %122 {offsets = [0, 384], sizes = [2, 128], strides = [1, 1]} : vector<2x512xf32> to vector<2x128xf32>
    %cst_61 = arith.constant 5.000000e-01 : f32
    %142 = vector.broadcast %cst_61 : f32 to vector<2x128xf32>
    %143 = arith.mulf %142, %141 : vector<2x128xf32>
    %144 = math.tanh %143 : vector<2x128xf32>
    %cst_62 = arith.constant 5.000000e-01 : f32
    %145 = vector.broadcast %cst_62 : f32 to vector<2x128xf32>
    %146 = arith.mulf %145, %144 : vector<2x128xf32>
    %cst_63 = arith.constant 5.000000e-01 : f32
    %147 = vector.broadcast %cst_63 : f32 to vector<2x128xf32>
    %148 = arith.addf %146, %147 : vector<2x128xf32>
    %149 = arith.mulf %138, %58 : vector<2x128xf32>
    %150 = arith.mulf %130, %140 : vector<2x128xf32>
    %151 = arith.addf %149, %150 : vector<2x128xf32>
    %152 = math.tanh %151 : vector<2x128xf32>
    %153 = arith.mulf %148, %152 : vector<2x128xf32>
    %154 = vector.broadcast %118 : vector<2x1xf32> to vector<2x128xf32>
    %155 = arith.mulf %153, %154 : vector<2x128xf32>
    %156 = vector.broadcast %118 : vector<2x1xf32> to vector<2x128xf32>
    %157 = arith.mulf %151, %156 : vector<2x128xf32>
    %158 = arith.index_cast %c1_i32 : i32 to index
    %c0_64 = arith.constant 0 : index
    %c0_65 = arith.constant 0 : index
    %159 = vector.load %arg7[%158, %c0_64, %c0_65] : memref<4x2x128xf32, #tpu.memory_space<vmem>>, vector<1x2x128xf32>
    %160 = vector.shape_cast %159 : vector<1x2x128xf32> to vector<2x128xf32>
    %161 = vector.shape_cast %155 : vector<2x128xf32> to vector<1x2x128xf32>
    tpu.vector_store %arg7[%158, %c0_64, %c0_65], %161 {strides = array<i32>} : memref<4x2x128xf32, #tpu.memory_space<vmem>>, vector<1x2x128xf32>,
    %c3_i32_66 = arith.constant 3 : i32
    %162 = arith.subi %c3_i32_66, %c1_i32 : i32
    %c0_67 = arith.constant 0 : index
    %163 = arith.index_cast %162 : i32 to index
    %c0_68 = arith.constant 0 : index
    %c0_69 = arith.constant 0 : index
    %164 = vector.load %arg2[%c0_67, %163, %c0_68, %c0_69] : memref<1x4x2x512xf32, #tpu.memory_space<vmem>>, vector<1x1x2x512xf32>
    %165 = vector.shape_cast %164 : vector<1x1x2x512xf32> to vector<2x512xf32>
    %166 = arith.index_cast %162 : i32 to index
    %c0_70 = arith.constant 0 : index
    %c0_71 = arith.constant 0 : index
    %167 = vector.load %arg4[%166, %c0_70, %c0_71] : memref<4x2x1xf32, #tpu.memory_space<vmem>>, vector<1x2x1xf32>
    %168 = vector.shape_cast %167 : vector<1x2x1xf32> to vector<2x1xf32>
    %cst_72 = arith.constant dense<0.000000e+00> : vector<2x512xf32>
    %169 = tpu.matmul %106, %6, %cst_72 {dimension_numbers = #tpu.dot_dimension_numbers<[1], [0], [0], [1], [0, 0, 1, 1], [], []>} : vector<2x128xf32>, vector<128x512xf32>, vector<2x512xf32> -> vector<2x512xf32>
    %170 = arith.addf %165, %169 : vector<2x512xf32>
    %171 = vector.broadcast %9 : vector<1x512xf32> to vector<2x512xf32>
    %172 = arith.addf %170, %171 : vector<2x512xf32>
    %173 = vector.extract_strided_slice %172 {offsets = [0, 0], sizes = [2, 128], strides = [1, 1]} : vector<2x512xf32> to vector<2x128xf32>
    %cst_73 = arith.constant 5.000000e-01 : f32
    %174 = vector.broadcast %cst_73 : f32 to vector<2x128xf32>
    %175 = arith.mulf %174, %173 : vector<2x128xf32>
    %176 = math.tanh %175 : vector<2x128xf32>
    %cst_74 = arith.constant 5.000000e-01 : f32
    %177 = vector.broadcast %cst_74 : f32 to vector<2x128xf32>
    %178 = arith.mulf %177, %176 : vector<2x128xf32>
    %cst_75 = arith.constant 5.000000e-01 : f32
    %179 = vector.broadcast %cst_75 : f32 to vector<2x128xf32>
    %180 = arith.addf %178, %179 : vector<2x128xf32>
    %181 = vector.extract_strided_slice %172 {offsets = [0, 128], sizes = [2, 128], strides = [1, 1]} : vector<2x512xf32> to vector<2x128xf32>
    %cst_76 = arith.constant 5.000000e-01 : f32
    %182 = vector.broadcast %cst_76 : f32 to vector<2x128xf32>
    %183 = arith.mulf %182, %181 : vector<2x128xf32>
    %184 = math.tanh %183 : vector<2x128xf32>
    %cst_77 = arith.constant 5.000000e-01 : f32
    %185 = vector.broadcast %cst_77 : f32 to vector<2x128xf32>
    %186 = arith.mulf %185, %184 : vector<2x128xf32>
    %cst_78 = arith.constant 5.000000e-01 : f32
    %187 = vector.broadcast %cst_78 : f32 to vector<2x128xf32>
    %188 = arith.addf %186, %187 : vector<2x128xf32>
    %189 = vector.extract_strided_slice %172 {offsets = [0, 256], sizes = [2, 128], strides = [1, 1]} : vector<2x512xf32> to vector<2x128xf32>
    %190 = math.tanh %189 : vector<2x128xf32>
    %191 = vector.extract_strided_slice %172 {offsets = [0, 384], sizes = [2, 128], strides = [1, 1]} : vector<2x512xf32> to vector<2x128xf32>
    %cst_79 = arith.constant 5.000000e-01 : f32
    %192 = vector.broadcast %cst_79 : f32 to vector<2x128xf32>
    %193 = arith.mulf %192, %191 : vector<2x128xf32>
    %194 = math.tanh %193 : vector<2x128xf32>
    %cst_80 = arith.constant 5.000000e-01 : f32
    %195 = vector.broadcast %cst_80 : f32 to vector<2x128xf32>
    %196 = arith.mulf %195, %194 : vector<2x128xf32>
    %cst_81 = arith.constant 5.000000e-01 : f32
    %197 = vector.broadcast %cst_81 : f32 to vector<2x128xf32>
    %198 = arith.addf %196, %197 : vector<2x128xf32>
    %199 = arith.mulf %188, %108 : vector<2x128xf32>
    %200 = arith.mulf %180, %190 : vector<2x128xf32>
    %201 = arith.addf %199, %200 : vector<2x128xf32>
    %202 = math.tanh %201 : vector<2x128xf32>
    %203 = arith.mulf %198, %202 : vector<2x128xf32>
    %204 = vector.broadcast %168 : vector<2x1xf32> to vector<2x128xf32>
    %205 = arith.mulf %203, %204 : vector<2x128xf32>
    %206 = vector.broadcast %168 : vector<2x1xf32> to vector<2x128xf32>
    %207 = arith.mulf %201, %206 : vector<2x128xf32>
    %208 = arith.index_cast %162 : i32 to index
    %c0_82 = arith.constant 0 : index
    %c0_83 = arith.constant 0 : index
    %209 = vector.load %arg8[%208, %c0_82, %c0_83] : memref<4x2x128xf32, #tpu.memory_space<vmem>>, vector<1x2x128xf32>
    %210 = vector.shape_cast %209 : vector<1x2x128xf32> to vector<2x128xf32>
    %211 = vector.shape_cast %205 : vector<2x128xf32> to vector<1x2x128xf32>
    tpu.vector_store %arg8[%208, %c0_82, %c0_83], %211 {strides = array<i32>} : memref<4x2x128xf32, #tpu.memory_space<vmem>>, vector<1x2x128xf32>,
    %c2_i32 = arith.constant 2 : i32
    %c0_84 = arith.constant 0 : index
    %212 = arith.index_cast %c2_i32 : i32 to index
    %c0_85 = arith.constant 0 : index
    %c0_86 = arith.constant 0 : index
    %213 = vector.load %arg1[%c0_84, %212, %c0_85, %c0_86] : memref<1x4x2x512xf32, #tpu.memory_space<vmem>>, vector<1x1x2x512xf32>
    %214 = vector.shape_cast %213 : vector<1x1x2x512xf32> to vector<2x512xf32>
    %215 = arith.index_cast %c2_i32 : i32 to index
    %c0_87 = arith.constant 0 : index
    %c0_88 = arith.constant 0 : index
    %216 = vector.load %arg3[%215, %c0_87, %c0_88] : memref<4x2x1xf32, #tpu.memory_space<vmem>>, vector<1x2x1xf32>
    %217 = vector.shape_cast %216 : vector<1x2x1xf32> to vector<2x1xf32>
    %cst_89 = arith.constant dense<0.000000e+00> : vector<2x512xf32>
    %218 = tpu.matmul %155, %4, %cst_89 {dimension_numbers = #tpu.dot_dimension_numbers<[1], [0], [0], [1], [0, 0, 1, 1], [], []>} : vector<2x128xf32>, vector<128x512xf32>, vector<2x512xf32> -> vector<2x512xf32>
    %219 = arith.addf %214, %218 : vector<2x512xf32>
    %220 = vector.broadcast %8 : vector<1x512xf32> to vector<2x512xf32>
    %221 = arith.addf %219, %220 : vector<2x512xf32>
    %222 = vector.extract_strided_slice %221 {offsets = [0, 0], sizes = [2, 128], strides = [1, 1]} : vector<2x512xf32> to vector<2x128xf32>
    %cst_90 = arith.constant 5.000000e-01 : f32
    %223 = vector.broadcast %cst_90 : f32 to vector<2x128xf32>
    %224 = arith.mulf %223, %222 : vector<2x128xf32>
    %225 = math.tanh %224 : vector<2x128xf32>
    %cst_91 = arith.constant 5.000000e-01 : f32
    %226 = vector.broadcast %cst_91 : f32 to vector<2x128xf32>
    %227 = arith.mulf %226, %225 : vector<2x128xf32>
    %cst_92 = arith.constant 5.000000e-01 : f32
    %228 = vector.broadcast %cst_92 : f32 to vector<2x128xf32>
    %229 = arith.addf %227, %228 : vector<2x128xf32>
    %230 = vector.extract_strided_slice %221 {offsets = [0, 128], sizes = [2, 128], strides = [1, 1]} : vector<2x512xf32> to vector<2x128xf32>
    %cst_93 = arith.constant 5.000000e-01 : f32
    %231 = vector.broadcast %cst_93 : f32 to vector<2x128xf32>
    %232 = arith.mulf %231, %230 : vector<2x128xf32>
    %233 = math.tanh %232 : vector<2x128xf32>
    %cst_94 = arith.constant 5.000000e-01 : f32
    %234 = vector.broadcast %cst_94 : f32 to vector<2x128xf32>
    %235 = arith.mulf %234, %233 : vector<2x128xf32>
    %cst_95 = arith.constant 5.000000e-01 : f32
    %236 = vector.broadcast %cst_95 : f32 to vector<2x128xf32>
    %237 = arith.addf %235, %236 : vector<2x128xf32>
    %238 = vector.extract_strided_slice %221 {offsets = [0, 256], sizes = [2, 128], strides = [1, 1]} : vector<2x512xf32> to vector<2x128xf32>
    %239 = math.tanh %238 : vector<2x128xf32>
    %240 = vector.extract_strided_slice %221 {offsets = [0, 384], sizes = [2, 128], strides = [1, 1]} : vector<2x512xf32> to vector<2x128xf32>
    %cst_96 = arith.constant 5.000000e-01 : f32
    %241 = vector.broadcast %cst_96 : f32 to vector<2x128xf32>
    %242 = arith.mulf %241, %240 : vector<2x128xf32>
    %243 = math.tanh %242 : vector<2x128xf32>
    %cst_97 = arith.constant 5.000000e-01 : f32
    %244 = vector.broadcast %cst_97 : f32 to vector<2x128xf32>
    %245 = arith.mulf %244, %243 : vector<2x128xf32>
    %cst_98 = arith.constant 5.000000e-01 : f32
    %246 = vector.broadcast %cst_98 : f32 to vector<2x128xf32>
    %247 = arith.addf %245, %246 : vector<2x128xf32>
    %248 = arith.mulf %237, %157 : vector<2x128xf32>
    %249 = arith.mulf %229, %239 : vector<2x128xf32>
    %250 = arith.addf %248, %249 : vector<2x128xf32>
    %251 = math.tanh %250 : vector<2x128xf32>
    %252 = arith.mulf %247, %251 : vector<2x128xf32>
    %253 = vector.broadcast %217 : vector<2x1xf32> to vector<2x128xf32>
    %254 = arith.mulf %252, %253 : vector<2x128xf32>
    %255 = vector.broadcast %217 : vector<2x1xf32> to vector<2x128xf32>
    %256 = arith.mulf %250, %255 : vector<2x128xf32>
    %257 = arith.index_cast %c2_i32 : i32 to index
    %c0_99 = arith.constant 0 : index
    %c0_100 = arith.constant 0 : index
    %258 = vector.load %arg7[%257, %c0_99, %c0_100] : memref<4x2x128xf32, #tpu.memory_space<vmem>>, vector<1x2x128xf32>
    %259 = vector.shape_cast %258 : vector<1x2x128xf32> to vector<2x128xf32>
    %260 = vector.shape_cast %254 : vector<2x128xf32> to vector<1x2x128xf32>
    tpu.vector_store %arg7[%257, %c0_99, %c0_100], %260 {strides = array<i32>} : memref<4x2x128xf32, #tpu.memory_space<vmem>>, vector<1x2x128xf32>,
    %c3_i32_101 = arith.constant 3 : i32
    %261 = arith.subi %c3_i32_101, %c2_i32 : i32
    %c0_102 = arith.constant 0 : index
    %262 = arith.index_cast %261 : i32 to index
    %c0_103 = arith.constant 0 : index
    %c0_104 = arith.constant 0 : index
    %263 = vector.load %arg2[%c0_102, %262, %c0_103, %c0_104] : memref<1x4x2x512xf32, #tpu.memory_space<vmem>>, vector<1x1x2x512xf32>
    %264 = vector.shape_cast %263 : vector<1x1x2x512xf32> to vector<2x512xf32>
    %265 = arith.index_cast %261 : i32 to index
    %c0_105 = arith.constant 0 : index
    %c0_106 = arith.constant 0 : index
    %266 = vector.load %arg4[%265, %c0_105, %c0_106] : memref<4x2x1xf32, #tpu.memory_space<vmem>>, vector<1x2x1xf32>
    %267 = vector.shape_cast %266 : vector<1x2x1xf32> to vector<2x1xf32>
    %cst_107 = arith.constant dense<0.000000e+00> : vector<2x512xf32>
    %268 = tpu.matmul %205, %6, %cst_107 {dimension_numbers = #tpu.dot_dimension_numbers<[1], [0], [0], [1], [0, 0, 1, 1], [], []>} : vector<2x128xf32>, vector<128x512xf32>, vector<2x512xf32> -> vector<2x512xf32>
    %269 = arith.addf %264, %268 : vector<2x512xf32>
    %270 = vector.broadcast %9 : vector<1x512xf32> to vector<2x512xf32>
    %271 = arith.addf %269, %270 : vector<2x512xf32>
    %272 = vector.extract_strided_slice %271 {offsets = [0, 0], sizes = [2, 128], strides = [1, 1]} : vector<2x512xf32> to vector<2x128xf32>
    %cst_108 = arith.constant 5.000000e-01 : f32
    %273 = vector.broadcast %cst_108 : f32 to vector<2x128xf32>
    %274 = arith.mulf %273, %272 : vector<2x128xf32>
    %275 = math.tanh %274 : vector<2x128xf32>
    %cst_109 = arith.constant 5.000000e-01 : f32
    %276 = vector.broadcast %cst_109 : f32 to vector<2x128xf32>
    %277 = arith.mulf %276, %275 : vector<2x128xf32>
    %cst_110 = arith.constant 5.000000e-01 : f32
    %278 = vector.broadcast %cst_110 : f32 to vector<2x128xf32>
    %279 = arith.addf %277, %278 : vector<2x128xf32>
    %280 = vector.extract_strided_slice %271 {offsets = [0, 128], sizes = [2, 128], strides = [1, 1]} : vector<2x512xf32> to vector<2x128xf32>
    %cst_111 = arith.constant 5.000000e-01 : f32
    %281 = vector.broadcast %cst_111 : f32 to vector<2x128xf32>
    %282 = arith.mulf %281, %280 : vector<2x128xf32>
    %283 = math.tanh %282 : vector<2x128xf32>
    %cst_112 = arith.constant 5.000000e-01 : f32
    %284 = vector.broadcast %cst_112 : f32 to vector<2x128xf32>
    %285 = arith.mulf %284, %283 : vector<2x128xf32>
    %cst_113 = arith.constant 5.000000e-01 : f32
    %286 = vector.broadcast %cst_113 : f32 to vector<2x128xf32>
    %287 = arith.addf %285, %286 : vector<2x128xf32>
    %288 = vector.extract_strided_slice %271 {offsets = [0, 256], sizes = [2, 128], strides = [1, 1]} : vector<2x512xf32> to vector<2x128xf32>
    %289 = math.tanh %288 : vector<2x128xf32>
    %290 = vector.extract_strided_slice %271 {offsets = [0, 384], sizes = [2, 128], strides = [1, 1]} : vector<2x512xf32> to vector<2x128xf32>
    %cst_114 = arith.constant 5.000000e-01 : f32
    %291 = vector.broadcast %cst_114 : f32 to vector<2x128xf32>
    %292 = arith.mulf %291, %290 : vector<2x128xf32>
    %293 = math.tanh %292 : vector<2x128xf32>
    %cst_115 = arith.constant 5.000000e-01 : f32
    %294 = vector.broadcast %cst_115 : f32 to vector<2x128xf32>
    %295 = arith.mulf %294, %293 : vector<2x128xf32>
    %cst_116 = arith.constant 5.000000e-01 : f32
    %296 = vector.broadcast %cst_116 : f32 to vector<2x128xf32>
    %297 = arith.addf %295, %296 : vector<2x128xf32>
    %298 = arith.mulf %287, %207 : vector<2x128xf32>
    %299 = arith.mulf %279, %289 : vector<2x128xf32>
    %300 = arith.addf %298, %299 : vector<2x128xf32>
    %301 = math.tanh %300 : vector<2x128xf32>
    %302 = arith.mulf %297, %301 : vector<2x128xf32>
    %303 = vector.broadcast %267 : vector<2x1xf32> to vector<2x128xf32>
    %304 = arith.mulf %302, %303 : vector<2x128xf32>
    %305 = vector.broadcast %267 : vector<2x1xf32> to vector<2x128xf32>
    %306 = arith.mulf %300, %305 : vector<2x128xf32>
    %307 = arith.index_cast %261 : i32 to index
    %c0_117 = arith.constant 0 : index
    %c0_118 = arith.constant 0 : index
    %308 = vector.load %arg8[%307, %c0_117, %c0_118] : memref<4x2x128xf32, #tpu.memory_space<vmem>>, vector<1x2x128xf32>
    %309 = vector.shape_cast %308 : vector<1x2x128xf32> to vector<2x128xf32>
    %310 = vector.shape_cast %304 : vector<2x128xf32> to vector<1x2x128xf32>
    tpu.vector_store %arg8[%307, %c0_117, %c0_118], %310 {strides = array<i32>} : memref<4x2x128xf32, #tpu.memory_space<vmem>>, vector<1x2x128xf32>,
    %c3_i32_119 = arith.constant 3 : i32
    %c0_120 = arith.constant 0 : index
    %311 = arith.index_cast %c3_i32_119 : i32 to index
    %c0_121 = arith.constant 0 : index
    %c0_122 = arith.constant 0 : index
    %312 = vector.load %arg1[%c0_120, %311, %c0_121, %c0_122] : memref<1x4x2x512xf32, #tpu.memory_space<vmem>>, vector<1x1x2x512xf32>
    %313 = vector.shape_cast %312 : vector<1x1x2x512xf32> to vector<2x512xf32>
    %314 = arith.index_cast %c3_i32_119 : i32 to index
    %c0_123 = arith.constant 0 : index
    %c0_124 = arith.constant 0 : index
    %315 = vector.load %arg3[%314, %c0_123, %c0_124] : memref<4x2x1xf32, #tpu.memory_space<vmem>>, vector<1x2x1xf32>
    %316 = vector.shape_cast %315 : vector<1x2x1xf32> to vector<2x1xf32>
    %cst_125 = arith.constant dense<0.000000e+00> : vector<2x512xf32>
    %317 = tpu.matmul %254, %4, %cst_125 {dimension_numbers = #tpu.dot_dimension_numbers<[1], [0], [0], [1], [0, 0, 1, 1], [], []>} : vector<2x128xf32>, vector<128x512xf32>, vector<2x512xf32> -> vector<2x512xf32>
    %318 = arith.addf %313, %317 : vector<2x512xf32>
    %319 = vector.broadcast %8 : vector<1x512xf32> to vector<2x512xf32>
    %320 = arith.addf %318, %319 : vector<2x512xf32>
    %321 = vector.extract_strided_slice %320 {offsets = [0, 0], sizes = [2, 128], strides = [1, 1]} : vector<2x512xf32> to vector<2x128xf32>
    %cst_126 = arith.constant 5.000000e-01 : f32
    %322 = vector.broadcast %cst_126 : f32 to vector<2x128xf32>
    %323 = arith.mulf %322, %321 : vector<2x128xf32>
    %324 = math.tanh %323 : vector<2x128xf32>
    %cst_127 = arith.constant 5.000000e-01 : f32
    %325 = vector.broadcast %cst_127 : f32 to vector<2x128xf32>
    %326 = arith.mulf %325, %324 : vector<2x128xf32>
    %cst_128 = arith.constant 5.000000e-01 : f32
    %327 = vector.broadcast %cst_128 : f32 to vector<2x128xf32>
    %328 = arith.addf %326, %327 : vector<2x128xf32>
    %329 = vector.extract_strided_slice %320 {offsets = [0, 128], sizes = [2, 128], strides = [1, 1]} : vector<2x512xf32> to vector<2x128xf32>
    %cst_129 = arith.constant 5.000000e-01 : f32
    %330 = vector.broadcast %cst_129 : f32 to vector<2x128xf32>
    %331 = arith.mulf %330, %329 : vector<2x128xf32>
    %332 = math.tanh %331 : vector<2x128xf32>
    %cst_130 = arith.constant 5.000000e-01 : f32
    %333 = vector.broadcast %cst_130 : f32 to vector<2x128xf32>
    %334 = arith.mulf %333, %332 : vector<2x128xf32>
    %cst_131 = arith.constant 5.000000e-01 : f32
    %335 = vector.broadcast %cst_131 : f32 to vector<2x128xf32>
    %336 = arith.addf %334, %335 : vector<2x128xf32>
    %337 = vector.extract_strided_slice %320 {offsets = [0, 256], sizes = [2, 128], strides = [1, 1]} : vector<2x512xf32> to vector<2x128xf32>
    %338 = math.tanh %337 : vector<2x128xf32>
    %339 = vector.extract_strided_slice %320 {offsets = [0, 384], sizes = [2, 128], strides = [1, 1]} : vector<2x512xf32> to vector<2x128xf32>
    %cst_132 = arith.constant 5.000000e-01 : f32
    %340 = vector.broadcast %cst_132 : f32 to vector<2x128xf32>
    %341 = arith.mulf %340, %339 : vector<2x128xf32>
    %342 = math.tanh %341 : vector<2x128xf32>
    %cst_133 = arith.constant 5.000000e-01 : f32
    %343 = vector.broadcast %cst_133 : f32 to vector<2x128xf32>
    %344 = arith.mulf %343, %342 : vector<2x128xf32>
    %cst_134 = arith.constant 5.000000e-01 : f32
    %345 = vector.broadcast %cst_134 : f32 to vector<2x128xf32>
    %346 = arith.addf %344, %345 : vector<2x128xf32>
    %347 = arith.mulf %336, %256 : vector<2x128xf32>
    %348 = arith.mulf %328, %338 : vector<2x128xf32>
    %349 = arith.addf %347, %348 : vector<2x128xf32>
    %350 = math.tanh %349 : vector<2x128xf32>
    %351 = arith.mulf %346, %350 : vector<2x128xf32>
    %352 = vector.broadcast %316 : vector<2x1xf32> to vector<2x128xf32>
    %353 = arith.mulf %351, %352 : vector<2x128xf32>
    %354 = vector.broadcast %316 : vector<2x1xf32> to vector<2x128xf32>
    %355 = arith.mulf %349, %354 : vector<2x128xf32>
    %356 = arith.index_cast %c3_i32_119 : i32 to index
    %c0_135 = arith.constant 0 : index
    %c0_136 = arith.constant 0 : index
    %357 = vector.load %arg7[%356, %c0_135, %c0_136] : memref<4x2x128xf32, #tpu.memory_space<vmem>>, vector<1x2x128xf32>
    %358 = vector.shape_cast %357 : vector<1x2x128xf32> to vector<2x128xf32>
    %359 = vector.shape_cast %353 : vector<2x128xf32> to vector<1x2x128xf32>
    tpu.vector_store %arg7[%356, %c0_135, %c0_136], %359 {strides = array<i32>} : memref<4x2x128xf32, #tpu.memory_space<vmem>>, vector<1x2x128xf32>,
    %c3_i32_137 = arith.constant 3 : i32
    %360 = arith.subi %c3_i32_137, %c3_i32_119 : i32
    %c0_138 = arith.constant 0 : index
    %361 = arith.index_cast %360 : i32 to index
    %c0_139 = arith.constant 0 : index
    %c0_140 = arith.constant 0 : index
    %362 = vector.load %arg2[%c0_138, %361, %c0_139, %c0_140] : memref<1x4x2x512xf32, #tpu.memory_space<vmem>>, vector<1x1x2x512xf32>
    %363 = vector.shape_cast %362 : vector<1x1x2x512xf32> to vector<2x512xf32>
    %364 = arith.index_cast %360 : i32 to index
    %c0_141 = arith.constant 0 : index
    %c0_142 = arith.constant 0 : index
    %365 = vector.load %arg4[%364, %c0_141, %c0_142] : memref<4x2x1xf32, #tpu.memory_space<vmem>>, vector<1x2x1xf32>
    %366 = vector.shape_cast %365 : vector<1x2x1xf32> to vector<2x1xf32>
    %cst_143 = arith.constant dense<0.000000e+00> : vector<2x512xf32>
    %367 = tpu.matmul %304, %6, %cst_143 {dimension_numbers = #tpu.dot_dimension_numbers<[1], [0], [0], [1], [0, 0, 1, 1], [], []>} : vector<2x128xf32>, vector<128x512xf32>, vector<2x512xf32> -> vector<2x512xf32>
    %368 = arith.addf %363, %367 : vector<2x512xf32>
    %369 = vector.broadcast %9 : vector<1x512xf32> to vector<2x512xf32>
    %370 = arith.addf %368, %369 : vector<2x512xf32>
    %371 = vector.extract_strided_slice %370 {offsets = [0, 0], sizes = [2, 128], strides = [1, 1]} : vector<2x512xf32> to vector<2x128xf32>
    %cst_144 = arith.constant 5.000000e-01 : f32
    %372 = vector.broadcast %cst_144 : f32 to vector<2x128xf32>
    %373 = arith.mulf %372, %371 : vector<2x128xf32>
    %374 = math.tanh %373 : vector<2x128xf32>
    %cst_145 = arith.constant 5.000000e-01 : f32
    %375 = vector.broadcast %cst_145 : f32 to vector<2x128xf32>
    %376 = arith.mulf %375, %374 : vector<2x128xf32>
    %cst_146 = arith.constant 5.000000e-01 : f32
    %377 = vector.broadcast %cst_146 : f32 to vector<2x128xf32>
    %378 = arith.addf %376, %377 : vector<2x128xf32>
    %379 = vector.extract_strided_slice %370 {offsets = [0, 128], sizes = [2, 128], strides = [1, 1]} : vector<2x512xf32> to vector<2x128xf32>
    %cst_147 = arith.constant 5.000000e-01 : f32
    %380 = vector.broadcast %cst_147 : f32 to vector<2x128xf32>
    %381 = arith.mulf %380, %379 : vector<2x128xf32>
    %382 = math.tanh %381 : vector<2x128xf32>
    %cst_148 = arith.constant 5.000000e-01 : f32
    %383 = vector.broadcast %cst_148 : f32 to vector<2x128xf32>
    %384 = arith.mulf %383, %382 : vector<2x128xf32>
    %cst_149 = arith.constant 5.000000e-01 : f32
    %385 = vector.broadcast %cst_149 : f32 to vector<2x128xf32>
    %386 = arith.addf %384, %385 : vector<2x128xf32>
    %387 = vector.extract_strided_slice %370 {offsets = [0, 256], sizes = [2, 128], strides = [1, 1]} : vector<2x512xf32> to vector<2x128xf32>
    %388 = math.tanh %387 : vector<2x128xf32>
    %389 = vector.extract_strided_slice %370 {offsets = [0, 384], sizes = [2, 128], strides = [1, 1]} : vector<2x512xf32> to vector<2x128xf32>
    %cst_150 = arith.constant 5.000000e-01 : f32
    %390 = vector.broadcast %cst_150 : f32 to vector<2x128xf32>
    %391 = arith.mulf %390, %389 : vector<2x128xf32>
    %392 = math.tanh %391 : vector<2x128xf32>
    %cst_151 = arith.constant 5.000000e-01 : f32
    %393 = vector.broadcast %cst_151 : f32 to vector<2x128xf32>
    %394 = arith.mulf %393, %392 : vector<2x128xf32>
    %cst_152 = arith.constant 5.000000e-01 : f32
    %395 = vector.broadcast %cst_152 : f32 to vector<2x128xf32>
    %396 = arith.addf %394, %395 : vector<2x128xf32>
    %397 = arith.mulf %386, %306 : vector<2x128xf32>
    %398 = arith.mulf %378, %388 : vector<2x128xf32>
    %399 = arith.addf %397, %398 : vector<2x128xf32>
    %400 = math.tanh %399 : vector<2x128xf32>
    %401 = arith.mulf %396, %400 : vector<2x128xf32>
    %402 = vector.broadcast %366 : vector<2x1xf32> to vector<2x128xf32>
    %403 = arith.mulf %401, %402 : vector<2x128xf32>
    %404 = vector.broadcast %366 : vector<2x1xf32> to vector<2x128xf32>
    %405 = arith.mulf %399, %404 : vector<2x128xf32>
    %406 = arith.index_cast %360 : i32 to index
    %c0_153 = arith.constant 0 : index
    %c0_154 = arith.constant 0 : index
    %407 = vector.load %arg8[%406, %c0_153, %c0_154] : memref<4x2x128xf32, #tpu.memory_space<vmem>>, vector<1x2x128xf32>
    %408 = vector.shape_cast %407 : vector<1x2x128xf32> to vector<2x128xf32>
    %409 = vector.shape_cast %403 : vector<2x128xf32> to vector<1x2x128xf32>
    tpu.vector_store %arg8[%406, %c0_153, %c0_154], %409 {strides = array<i32>} : memref<4x2x128xf32, #tpu.memory_space<vmem>>, vector<1x2x128xf32>,
    %c4_i32 = arith.constant 4 : i32
    %c0_155 = arith.constant 0 : index
    %c0_156 = arith.constant 0 : index
    %410 = vector.load %arg10[%c0_155, %c0_156] : memref<2x128xf32, #tpu.memory_space<vmem>>, vector<2x128xf32>
    tpu.vector_store %arg10[%c0_155, %c0_156], %353 {strides = array<i32>} : memref<2x128xf32, #tpu.memory_space<vmem>>, vector<2x128xf32>,
    %c0_157 = arith.constant 0 : index
    %c0_158 = arith.constant 0 : index
    %411 = vector.load %arg11[%c0_157, %c0_158] : memref<2x128xf32, #tpu.memory_space<vmem>>, vector<2x128xf32>
    tpu.vector_store %arg11[%c0_157, %c0_158], %355 {strides = array<i32>} : memref<2x128xf32, #tpu.memory_space<vmem>>, vector<2x128xf32>,
    %c0_159 = arith.constant 0 : index
    %c0_160 = arith.constant 0 : index
    %412 = vector.load %arg12[%c0_159, %c0_160] : memref<2x128xf32, #tpu.memory_space<vmem>>, vector<2x128xf32>
    tpu.vector_store %arg12[%c0_159, %c0_160], %403 {strides = array<i32>} : memref<2x128xf32, #tpu.memory_space<vmem>>, vector<2x128xf32>,
    %c0_161 = arith.constant 0 : index
    %c0_162 = arith.constant 0 : index
    %413 = vector.load %arg13[%c0_161, %c0_162] : memref<2x128xf32, #tpu.memory_space<vmem>>, vector<2x128xf32>
    tpu.vector_store %arg13[%c0_161, %c0_162], %405 {strides = array<i32>} : memref<2x128xf32, #tpu.memory_space<vmem>>, vector<2x128xf32>,
    return
  }
  func.func @transform_0(%arg0: i32) -> (i32, i32, i32, i32) {
    %c0_i32 = arith.constant 0 : i32
    %c0_i32_0 = arith.constant 0 : i32
    %c0_i32_1 = arith.constant 0 : i32
    %c0_i32_2 = arith.constant 0 : i32
    return %c0_i32, %arg0, %c0_i32_0, %c0_i32_1 : i32, i32, i32, i32
  }
  func.func @transform_1(%arg0: i32) -> (i32, i32, i32, i32) {
    %c2_i32 = arith.constant 2 : i32
    %0 = arith.subi %c2_i32, %arg0 : i32
    %c1_i32 = arith.constant 1 : i32
    %c0_i32 = arith.constant 0 : i32
    %c0_i32_0 = arith.constant 0 : i32
    %c0_i32_1 = arith.constant 0 : i32
    return %c1_i32, %0, %c0_i32, %c0_i32_0 : i32, i32, i32, i32
  }
  func.func @transform_2(%arg0: i32) -> (i32, i32, i32) {
    %c0_i32 = arith.constant 0 : i32
    %c0_i32_0 = arith.constant 0 : i32
    %c0_i32_1 = arith.constant 0 : i32
    return %arg0, %c0_i32, %c0_i32_0 : i32, i32, i32
  }
  func.func @transform_3(%arg0: i32) -> (i32, i32, i32) {
    %c2_i32 = arith.constant 2 : i32
    %0 = arith.subi %c2_i32, %arg0 : i32
    %c0_i32 = arith.constant 0 : i32
    %c0_i32_0 = arith.constant 0 : i32
    %c0_i32_1 = arith.constant 0 : i32
    return %0, %c0_i32, %c0_i32_0 : i32, i32, i32
  }
  func.func @transform_5(%arg0: i32) -> (i32, i32) {
    %c0_i32 = arith.constant 0 : i32
    %c0_i32_0 = arith.constant 0 : i32
    %c0_i32_1 = arith.constant 0 : i32
    return %c0_i32, %c0_i32_0 : i32, i32
  }
  func.func @transform_6(%arg0: i32) -> (i32, i32, i32) {
    %c0_i32 = arith.constant 0 : i32
    %c0_i32_0 = arith.constant 0 : i32
    %c0_i32_1 = arith.constant 0 : i32
    return %arg0, %c0_i32, %c0_i32_0 : i32, i32, i32
  }
  func.func @transform_7(%arg0: i32) -> (i32, i32, i32) {
    %c2_i32 = arith.constant 2 : i32
    %0 = arith.subi %c2_i32, %arg0 : i32
    %c0_i32 = arith.constant 0 : i32
    %c0_i32_0 = arith.constant 0 : i32
    %c0_i32_1 = arith.constant 0 : i32
    return %0, %c0_i32, %c0_i32_0 : i32, i32, i32
  }
}

</mosaic_0001>

<llo_original>
// kernel: encoder_forward.2
$region0: #{encoder_forward.2}
  #allocation0 [shape = 'u32[]', space=smem, size = 0x4, offset = 0x4, fixed_abs, tag = 'smem constant byte address 0x4 - core index']
  #allocation1 [shape = 'u32[72,128]{1,0:T(1,128)}', space=vmem, size = 0x9000, scoped, tag = 'internal scratch']
  #allocation2 [shape = 'f32[2,128,512]{2,1,0:T(8,128)}', space=vmem, size = 0x80000, scoped, tag = 'scratch operand']
  #allocation3 [shape = 'f32[2,128]{1,0:T(2,128)}', space=vmem, size = 0x400, scoped, tag = 'scratch operand']
  #allocation4 [shape = 'f32[2,128]{1,0:T(2,128)}', space=vmem, size = 0x400, scoped, tag = 'scratch operand']
  #allocation5 [shape = 'f32[2,128]{1,0:T(2,128)}', space=vmem, size = 0x400, scoped, tag = 'scratch operand']
  #allocation6 [shape = 'f32[2,128]{1,0:T(2,128)}', space=vmem, size = 0x400, scoped, tag = 'scratch operand']
  #allocation8 [shape = 's32[]', space=sflag, size = 0x4, offset = 0, fixed_abs, tag = 'sflag constant byte address 0x0 - dummy sync flag']
  %s0 = inlined_call_operand.vmem [shape: f32[2,12,2,512], index: 0, kind: input, shape index: {}, may-alias: {0,1}]
  %s1 = inlined_call_operand.vmem [shape: f32[2,12,2,512], index: 1, kind: input, shape index: {}, may-alias: {0,1}]
  %s2 = inlined_call_operand.vmem [shape: f32[12,2,1], index: 2, kind: input, shape index: {}, may-alias: {2,3}]
  %s3 = inlined_call_operand.vmem [shape: f32[12,2,1], index: 3, kind: input, shape index: {}, may-alias: {2,3}]
  %s4 = inlined_call_operand.vmem [shape: f32[2,128,512], index: 4, kind: input, shape index: {}]
  %s5 = inlined_call_operand.vmem [shape: f32[2,512], index: 5, kind: input, shape index: {}]
  %s6 = inlined_call_operand.vmem [shape: f32[12,2,128], index: 6, kind: output, shape index: {0}]
  %s7 = inlined_call_operand.vmem [shape: f32[12,2,128], index: 7, kind: output, shape index: {1}]
  %8 = xla_tuple %s6, %s7
  %s9 = sld [smem:[#allocation0]]
  $region85: #{encoder_forward.2} parent=0
    _
  %s11 = ssub.s32 1, %s9
  %s12 = scalar_select 0, %s11, %s9
  loop: start=0, step=1, limit=5
  $region2: #{encoder_forward.2} parent=0 // loop_pre_header
    _
  $region3: #{encoder_forward.2} parent=0 // loop_header
    %s14 = sphi 0, %s18
    %p15 = scmp.ge.s32.totalorder %s14, 5
    %s24 = sphi 0, %s26
    %s27 = sphi 0, %s24
    %s28 = sphi 0, %s27
    %s44 = sphi 0, %s28
    %s52 = sphi 0, %s54
    %s55 = sphi 0, %s52
    %s56 = sphi 0, %s55
    %s72 = sphi 0, %s56
    %s78 = sphi 0, %s80
    %s81 = sphi 0, %s78
    %s82 = sphi 0, %s81
    %s98 = sphi 0, %s82
    %s106 = sphi 0, %s108
    %s109 = sphi 0, %s106
    %s110 = sphi 0, %s109
    %s126 = sphi 0, %s110
    %s130 = sphi 0, %s130
    %s132 = sphi 0, %s130
    %s133 = sphi 0, %s132
    %s147 = sphi 0, %s133
    %s153 = sphi 0, %s155
    %s156 = sphi 0, %s153
    %s157 = sphi 0, %s156
    %s173 = sphi 0, %s157
    %s181 = sphi 0, %s183
    %s184 = sphi 0, %s181
    %s185 = sphi 0, %s184
    %s201 = sphi 0, %s185
  $region4: #{encoder_forward.2} parent=0 // loop_header_branch
    %17 = sbr.rel (%p15) target = $region8
  $region5: #{encoder_forward.2} parent=0 // loop_body
    %s19 = ssub.s32 %s14, 1
    %s20 = ssub.s32 %s14, 2
    %s21 = sadd.s32 %s14, 1
    %s22 = ssub.s32 %s14, %s21
    %p23 = scmp.eq.s32.totalorder %s22, 0
    %s25 = sadd.s32 %s24, 1
    %s26 = scalar_select %p23, %s24, %s25
    %p29 = pneg %p23
    %p30 = scmp.eq.s32.totalorder %s14, 2
    %p31 = por %p29, %p30
    %p32 = scmp.ne.s32.totalorder %s24, %s27
    %p33 = scmp.eq.s32.totalorder %s14, 0
    %p34 = por %p32, %p33
    %p35 = scmp.ne.s32.totalorder %s24, %s27
    %p36 = scmp.eq.s32.totalorder %s19, 2
    %p37 = por %p35, %p36
    %p38 = scmp.ne.s32.totalorder %s27, %s28
    %p39 = scmp.eq.s32.totalorder %s19, 0
    %p40 = por %p38, %p39
    %p41 = scmp.ne.s32.totalorder %s27, %s28
    %p42 = scmp.eq.s32.totalorder %s20, 2
    %p43 = por %p41, %p42
    %p45 = scmp.ne.s32.totalorder %s28, %s44
    %p46 = scmp.eq.s32.totalorder %s20, 0
    %p47 = por %p45, %p46
    %s48 = ssub.s32 2, %s14
    %s49 = ssub.s32 2, %s21
    %s50 = ssub.s32 %s48, %s49
    %p51 = scmp.eq.s32.totalorder %s50, 0
    %s53 = sadd.s32 %s52, 1
    %s54 = scalar_select %p51, %s52, %s53
    %p57 = pneg %p51
    %p58 = scmp.eq.s32.totalorder %s14, 2
    %p59 = por %p57, %p58
    %p60 = scmp.ne.s32.totalorder %s52, %s55
    %p61 = scmp.eq.s32.totalorder %s14, 0
    %p62 = por %p60, %p61
    %p63 = scmp.ne.s32.totalorder %s52, %s55
    %p64 = scmp.eq.s32.totalorder %s19, 2
    %p65 = por %p63, %p64
    %p66 = scmp.ne.s32.totalorder %s55, %s56
    %p67 = scmp.eq.s32.totalorder %s19, 0
    %p68 = por %p66, %p67
    %p69 = scmp.ne.s32.totalorder %s55, %s56
    %p70 = scmp.eq.s32.totalorder %s20, 2
    %p71 = por %p69, %p70
    %p73 = scmp.ne.s32.totalorder %s56, %s72
    %p74 = scmp.eq.s32.totalorder %s20, 0
    %p75 = por %p73, %p74
    %s76 = ssub.s32 %s14, %s21
    %p77 = scmp.eq.s32.totalorder %s76, 0
    %s79 = sadd.s32 %s78, 1
    %s80 = scalar_select %p77, %s78, %s79
    %p83 = pneg %p77
    %p84 = scmp.eq.s32.totalorder %s14, 2
    %p85 = por %p83, %p84
    %p86 = scmp.ne.s32.totalorder %s78, %s81
    %p87 = scmp.eq.s32.totalorder %s14, 0
    %p88 = por %p86, %p87
    %p89 = scmp.ne.s32.totalorder %s78, %s81
    %p90 = scmp.eq.s32.totalorder %s19, 2
    %p91 = por %p89, %p90
    %p92 = scmp.ne.s32.totalorder %s81, %s82
    %p93 = scmp.eq.s32.totalorder %s19, 0
    %p94 = por %p92, %p93
    %p95 = scmp.ne.s32.totalorder %s81, %s82
    %p96 = scmp.eq.s32.totalorder %s20, 2
    %p97 = por %p95, %p96
    %p99 = scmp.ne.s32.totalorder %s82, %s98
    %p100 = scmp.eq.s32.totalorder %s20, 0
    %p101 = por %p99, %p100
    %s102 = ssub.s32 2, %s14
    %s103 = ssub.s32 2, %s21
    %s104 = ssub.s32 %s102, %s103
    %p105 = scmp.eq.s32.totalorder %s104, 0
    %s107 = sadd.s32 %s106, 1
    %s108 = scalar_select %p105, %s106, %s107
    %p111 = pneg %p105
    %p112 = scmp.eq.s32.totalorder %s14, 2
    %p113 = por %p111, %p112
    %p114 = scmp.ne.s32.totalorder %s106, %s109
    %p115 = scmp.eq.s32.totalorder %s14, 0
    %p116 = por %p114, %p115
    %p117 = scmp.ne.s32.totalorder %s106, %s109
    %p118 = scmp.eq.s32.totalorder %s19, 2
    %p119 = por %p117, %p118
    %p120 = scmp.ne.s32.totalorder %s109, %s110
    %p121 = scmp.eq.s32.totalorder %s19, 0
    %p122 = por %p120, %p121
    %p123 = scmp.ne.s32.totalorder %s109, %s110
    %p124 = scmp.eq.s32.totalorder %s20, 2
    %p125 = por %p123, %p124
    %p127 = scmp.ne.s32.totalorder %s110, %s126
    %p128 = scmp.eq.s32.totalorder %s20, 0
    %p129 = por %p127, %p128
    %s131 = sadd.s32 %s130, 1
    %p134 = scmp.eq.s32.totalorder %s14, 2
    %p135 = scmp.ne.s32.totalorder %s130, %s132
    %p136 = scmp.eq.s32.totalorder %s14, 0
    %p137 = por %p135, %p136
    %p138 = scmp.ne.s32.totalorder %s130, %s132
    %p139 = scmp.eq.s32.totalorder %s19, 2
    %p140 = por %p138, %p139
    %p141 = scmp.ne.s32.totalorder %s132, %s133
    %p142 = scmp.eq.s32.totalorder %s19, 0
    %p143 = por %p141, %p142
    %p144 = scmp.ne.s32.totalorder %s132, %s133
    %p145 = scmp.eq.s32.totalorder %s20, 2
    %p146 = por %p144, %p145
    %p148 = scmp.ne.s32.totalorder %s133, %s147
    %p149 = scmp.eq.s32.totalorder %s20, 0
    %p150 = por %p148, %p149
    %s151 = ssub.s32 %s14, %s21
    %p152 = scmp.eq.s32.totalorder %s151, 0
    %s154 = sadd.s32 %s153, 1
    %s155 = scalar_select %p152, %s153, %s154
    %p158 = pneg %p152
    %p159 = scmp.eq.s32.totalorder %s14, 2
    %p160 = por %p158, %p159
    %p161 = scmp.ne.s32.totalorder %s153, %s156
    %p162 = scmp.eq.s32.totalorder %s14, 0
    %p163 = por %p161, %p162
    %p164 = scmp.ne.s32.totalorder %s153, %s156
    %p165 = scmp.eq.s32.totalorder %s19, 2
    %p166 = por %p164, %p165
    %p167 = scmp.ne.s32.totalorder %s156, %s157
    %p168 = scmp.eq.s32.totalorder %s19, 0
    %p169 = por %p167, %p168
    %p170 = scmp.ne.s32.totalorder %s156, %s157
    %p171 = scmp.eq.s32.totalorder %s20, 2
    %p172 = por %p170, %p171
    %p174 = scmp.ne.s32.totalorder %s157, %s173
    %p175 = scmp.eq.s32.totalorder %s20, 0
    %p176 = por %p174, %p175
    %s177 = ssub.s32 2, %s14
    %s178 = ssub.s32 2, %s21
    %s179 = ssub.s32 %s177, %s178
    %p180 = scmp.eq.s32.totalorder %s179, 0
    %s182 = sadd.s32 %s181, 1
    %s183 = scalar_select %p180, %s181, %s182
    %p186 = pneg %p180
    %p187 = scmp.eq.s32.totalorder %s14, 2
    %p188 = por %p186, %p187
    %p189 = scmp.ne.s32.totalorder %s181, %s184
    %p190 = scmp.eq.s32.totalorder %s14, 0
    %p191 = por %p189, %p190
    %p192 = scmp.ne.s32.totalorder %s181, %s184
    %p193 = scmp.eq.s32.totalorder %s19, 2
    %p194 = por %p192, %p193
    %p195 = scmp.ne.s32.totalorder %s184, %s185
    %p196 = scmp.eq.s32.totalorder %s19, 0
    %p197 = por %p195, %p196
    %p198 = scmp.ne.s32.totalorder %s184, %s185
    %p199 = scmp.eq.s32.totalorder %s20, 2
    %p200 = por %p198, %p199
    %p202 = scmp.ne.s32.totalorder %s185, %s201
    %p203 = scmp.eq.s32.totalorder %s20, 0
    %p204 = por %p202, %p203
    %p205 = scmp.le.s32.totalorder 1, %s14
    %p206 = scmp.lt.s32.totalorder %s14, 4
    %p207 = pnand %p205, %p206
    %p208 = pneg %p207
    // Predicated region
    $region9: #{encoder_forward.2} parent=5 // pred_check
      _
    $region10: #{encoder_forward.2} parent=5 // pred_check_branch
      %210 = sbr.rel (%p207) target = $region12
    $region11: #{encoder_forward.2} parent=5 // pred_region
      %s211 = ssub.s32 %s14, 1
      // Predicated region
      $region13: #{encoder_forward.2} parent=11 // pred_check
        %p212 = pneg %p143
      $region14: #{encoder_forward.2} parent=11 // pred_check_branch
        %214 = sbr.rel (%p212) target = $region16
      $region15: #{encoder_forward.2} parent=11 // pred_region
        _
      $region16: #{encoder_forward.2} parent=11 // pred_fallthru
        _
    $region12: #{encoder_forward.2} parent=5 // pred_fallthru
      _
    %p215 = scmp.lt.s32.totalorder %s14, 3
    // Predicated region
    $region17: #{encoder_forward.2} parent=5 // pred_check
      %p216 = pneg %p215
    $region18: #{encoder_forward.2} parent=5 // pred_check_branch
      %218 = sbr.rel (%p216) target = $region20
    $region19: #{encoder_forward.2} parent=5 // pred_region
      // Predicated region
      $region21: #{encoder_forward.2} parent=19 // pred_check
        %p219 = pneg %p34
      $region22: #{encoder_forward.2} parent=19 // pred_check_branch
        %221 = sbr.rel (%p219) target = $region24
      $region23: #{encoder_forward.2} parent=19 // pred_region
        %s222 = smul.u32 4, %s14
        %p223 = scmp.lt.s32.totalorder %s222, 11
        %s224 = scalar_select %p223, %s222, 11
        %s225 = smul.addr %s224, 4
        %s226 = smul.addr %s225, 2
        %s227 = scalar_lea.vmem %s0, %s226
        %s228 = smul.u32 4, %s14
      $region24: #{encoder_forward.2} parent=19 // pred_fallthru
        _
      // Predicated region
      $region25: #{encoder_forward.2} parent=19 // pred_check
        %p229 = pneg %p62
      $region26: #{encoder_forward.2} parent=19 // pred_check_branch
        %231 = sbr.rel (%p229) target = $region28
      $region27: #{encoder_forward.2} parent=19 // pred_region
        %s232 = ssub.s32 2, %s14
        %s233 = smul.u32 4, %s232
        %p234 = scmp.lt.s32.totalorder %s233, 11
        %s235 = scalar_select %p234, %s233, 11
        %s236 = smul.addr %s235, 4
        %s237 = sadd.s32 %s236, 48
        %s238 = smul.addr %s237, 2
        %s239 = scalar_lea.vmem %s1, %s238
        %s240 = ssub.s32 2, %s14
        %s241 = smul.u32 4, %s240
      $region28: #{encoder_forward.2} parent=19 // pred_fallthru
        _
      // Predicated region
      $region29: #{encoder_forward.2} parent=19 // pred_check
        %p242 = pneg %p88
      $region30: #{encoder_forward.2} parent=19 // pred_check_branch
        %244 = sbr.rel (%p242) target = $region32
      $region31: #{encoder_forward.2} parent=19 // pred_region
        %s245 = smul.u32 4, %s14
        %p246 = scmp.lt.s32.totalorder %s245, 11
        %s247 = scalar_select %p246, %s245, 11
        %s248 = smul.addr %s247, 2
        %s249 = scalar_lea.vmem %s2, %s248
        %s250 = smul.u32 4, %s14
      $region32: #{encoder_forward.2} parent=19 // pred_fallthru
        _
      // Predicated region
      $region33: #{encoder_forward.2} parent=19 // pred_check
        %p251 = pneg %p116
      $region34: #{encoder_forward.2} parent=19 // pred_check_branch
        %253 = sbr.rel (%p251) target = $region36
      $region35: #{encoder_forward.2} parent=19 // pred_region
        %s254 = ssub.s32 2, %s14
        %s255 = smul.u32 4, %s254
        %p256 = scmp.lt.s32.totalorder %s255, 11
        %s257 = scalar_select %p256, %s255, 11
        %s258 = smul.addr %s257, 2
        %s259 = scalar_lea.vmem %s3, %s258
        %s260 = ssub.s32 2, %s14
        %s261 = smul.u32 4, %s260
      $region36: #{encoder_forward.2} parent=19 // pred_fallthru
        _
    $region20: #{encoder_forward.2} parent=5 // pred_fallthru
      _
    %p262 = scmp.le.s32.totalorder 1, %s14
    %p263 = scmp.lt.s32.totalorder %s14, 4
    %p264 = pnand %p262, %p263
    %p265 = pneg %p264
    // Predicated region
    $region37: #{encoder_forward.2} parent=5 // pred_check
      _
    $region38: #{encoder_forward.2} parent=5 // pred_check_branch
      %267 = sbr.rel (%p264) target = $region40
    $region39: #{encoder_forward.2} parent=5 // pred_region
      %s268 = ssub.s32 %s14, 1
      %s269 = smul.u32 4, %s19
      %p270 = scmp.lt.s32.totalorder %s269, 11
      %s271 = scalar_select %p270, %s269, 11
      %s272 = smul.addr %s271, 4
      %s273 = smul.addr %s272, 2
      %s274 = scalar_lea.vmem %s0, %s273
      %p275 = pneg %p40
      %p276 = pneg %p37
      %s277 = ssub.s32 2, %s19
      %s278 = smul.u32 4, %s277
      %p279 = scmp.lt.s32.totalorder %s278, 11
      %s280 = scalar_select %p279, %s278, 11
      %s281 = smul.addr %s280, 4
      %s282 = sadd.s32 %s281, 48
      %s283 = smul.addr %s282, 2
      %s284 = scalar_lea.vmem %s1, %s283
      %p285 = pneg %p68
      %p286 = pneg %p65
      %s287 = smul.u32 4, %s19
      %p288 = scmp.lt.s32.totalorder %s287, 11
      %s289 = scalar_select %p288, %s287, 11
      %s290 = smul.addr %s289, 2
      %s291 = scalar_lea.vmem %s2, %s290
      %p292 = pneg %p94
      %p293 = pneg %p91
      %s294 = ssub.s32 2, %s19
      %s295 = smul.u32 4, %s294
      %p296 = scmp.lt.s32.totalorder %s295, 11
      %s297 = scalar_select %p296, %s295, 11
      %s298 = smul.addr %s297, 2
      %s299 = scalar_lea.vmem %s3, %s298
      %p300 = pneg %p122
      %p301 = pneg %p119
      %p302 = pneg %p143
      %p303 = pneg %p140
      %p304 = pneg %p169
      %p305 = pneg %p166
      %s306 = smul.u32 4, %s19
      %p307 = scmp.lt.s32.totalorder %s306, 11
      %s308 = scalar_select %p307, %s306, 11
      %s309 = smul.addr %s308, 2
      %s310 = scalar_lea.vmem %s6, %s309
      %p311 = pneg %p197
      %p312 = pneg %p194
      %s313 = ssub.s32 2, %s19
      %s314 = smul.u32 4, %s313
      %p315 = scmp.lt.s32.totalorder %s314, 11
      %s316 = scalar_select %p315, %s314, 11
      %s317 = smul.addr %s316, 2
      %s318 = scalar_lea.vmem %s7, %s317
      %s319 = smul.u32 4, %s19
      %p320 = scmp.lt.s32.totalorder %s319, 11
      %s321 = scalar_select %p320, %s319, 11
      %s322 = smul.addr %s321, 4
      %s323 = smul.addr %s322, 2
      %s324 = scalar_lea.vmem %s0, %s323
      %s325 = smul.u32 4, %s19
      %s326 = ssub.s32 2, %s19
      %s327 = smul.u32 4, %s326
      %p328 = scmp.lt.s32.totalorder %s327, 11
      %s329 = scalar_select %p328, %s327, 11
      %s330 = smul.addr %s329, 4
      %s331 = sadd.s32 %s330, 48
      %s332 = smul.addr %s331, 2
      %s333 = scalar_lea.vmem %s1, %s332
      %s334 = ssub.s32 2, %s19
      %s335 = smul.u32 4, %s334
      %s336 = smul.u32 4, %s19
      %p337 = scmp.lt.s32.totalorder %s336, 11
      %s338 = scalar_select %p337, %s336, 11
      %s339 = smul.addr %s338, 2
      %s340 = scalar_lea.vmem %s2, %s339
      %s341 = smul.u32 4, %s19
      %s342 = ssub.s32 2, %s19
      %s343 = smul.u32 4, %s342
      %p344 = scmp.lt.s32.totalorder %s343, 11
      %s345 = scalar_select %p344, %s343, 11
      %s346 = smul.addr %s345, 2
      %s347 = scalar_lea.vmem %s3, %s346
      %s348 = ssub.s32 2, %s19
      %s349 = smul.u32 4, %s348
      %s350 = smul.u32 4, %s19
      %p351 = scmp.lt.s32.totalorder %s350, 11
      %s352 = scalar_select %p351, %s350, 11
      %s353 = smul.addr %s352, 2
      %s354 = scalar_lea.vmem %s6, %s353
      %s355 = smul.u32 4, %s19
      %s356 = ssub.s32 2, %s19
      %s357 = smul.u32 4, %s356
      %p358 = scmp.lt.s32.totalorder %s357, 11
      %s359 = scalar_select %p358, %s357, 11
      %s360 = smul.addr %s359, 2
      %s361 = scalar_lea.vmem %s7, %s360
      %s362 = ssub.s32 2, %s19
      %s363 = smul.u32 4, %s362
      %p364 = scmp.eq.s32.totalorder %s19, 0
      // Predicated region
      $region41: #{encoder_forward.2} parent=39 // pred_check
        %p365 = pneg %p364
      $region42: #{encoder_forward.2} parent=39 // pred_check_branch
        %367 = sbr.rel (%p365) target = $region44
      $region43: #{encoder_forward.2} parent=39 // pred_region
        $region45: #{encoder_forward.2} parent=43
          #allocation7 [shape = 's32[1]{0}', space=sflag, size = 0x4, scoped, tag = 'scoped memory for encoder_forward.2']
          // Predicated region
          $region46: #{encoder_forward.2} parent=45 // pred_check
            _
          $region47: #{encoder_forward.2} parent=45 // pred_check_branch
            %369 = sbr.rel (0) target = $region49
          $region48: #{encoder_forward.2} parent=45 // pred_region
            loop: start=0, step=1, limit=1
            $region50: #{encoder_forward.2} parent=48 // loop_pre_header
              _
            $region51: #{encoder_forward.2} parent=48 // loop_header
              %s371 = sphi 0, %s375
              %p372 = scmp.ge.s32.totalorder %s371, 1
              %s376 = sphi %s4, %s4
              %s377 = sphi [#allocation2], [#allocation2]
            $region52: #{encoder_forward.2} parent=48 // loop_header_branch
              %374 = sbr.rel (%p372) target = $region56
            $region53: #{encoder_forward.2} parent=48 // loop_body
              %v378 = vld [vmem:[%s376] sm:$0xff]
              %379 = vst [vmem:[%s377] sm:$0xff] %v378
              %v380 = vld [vmem:[%s376 + $0x8] sm:$0xff]
              %381 = vst [vmem:[%s377 + $0x8] sm:$0xff] %v380
              %v382 = vld [vmem:[%s376 + $0x10] sm:$0xff]
              %383 = vst [vmem:[%s377 + $0x10] sm:$0xff] %v382
              %v384 = vld [vmem:[%s376 + $0x18] sm:$0xff]
              %385 = vst [vmem:[%s377 + $0x18] sm:$0xff] %v384
              %v386 = vld [vmem:[%s376 + $0x20] sm:$0xff]
              %387 = vst [vmem:[%s377 + $0x20] sm:$0xff] %v386
              %v388 = vld [vmem:[%s376 + $0x28] sm:$0xff]
              %389 = vst [vmem:[%s377 + $0x28] sm:$0xff] %v388
              %v390 = vld [vmem:[%s376 + $0x30] sm:$0xff]
              %391 = vst [vmem:[%s377 + $0x30] sm:$0xff] %v390
              %v392 = vld [vmem:[%s376 + $0x38] sm:$0xff]
              %393 = vst [vmem:[%s377 + $0x38] sm:$0xff] %v392
              %v394 = vld [vmem:[%s376 + $0x40] sm:$0xff]
              %395 = vst [vmem:[%s377 + $0x40] sm:$0xff] %v394
              %v396 = vld [vmem:[%s376 + $0x48] sm:$0xff]
              %397 = vst [vmem:[%s377 + $0x48] sm:$0xff] %v396
              %v398 = vld [vmem:[%s376 + $0x50] sm:$0xff]
              %399 = vst [vmem:[%s377 + $0x50] sm:$0xff] %v398
              %v400 = vld [vmem:[%s376 + $0x58] sm:$0xff]
              %401 = vst [vmem:[%s377 + $0x58] sm:$0xff] %v400
              %v402 = vld [vmem:[%s376 + $0x60] sm:$0xff]
              %403 = vst [vmem:[%s377 + $0x60] sm:$0xff] %v402
              %v404 = vld [vmem:[%s376 + $0x68] sm:$0xff]
              %405 = vst [vmem:[%s377 + $0x68] sm:$0xff] %v404
              %v406 = vld [vmem:[%s376 + $0x70] sm:$0xff]
              %407 = vst [vmem:[%s377 + $0x70] sm:$0xff] %v406
              %v408 = vld [vmem:[%s376 + $0x78] sm:$0xff]
              %409 = vst [vmem:[%s377 + $0x78] sm:$0xff] %v408
              %v410 = vld [vmem:[%s376 + $0x80] sm:$0xff]
              %411 = vst [vmem:[%s377 + $0x80] sm:$0xff] %v410
              %v412 = vld [vmem:[%s376 + $0x88] sm:$0xff]
              %413 = vst [vmem:[%s377 + $0x88] sm:$0xff] %v412
              %v414 = vld [vmem:[%s376 + $0x90] sm:$0xff]
              %415 = vst [vmem:[%s377 + $0x90] sm:$0xff] %v414
              %v416 = vld [vmem:[%s376 + $0x98] sm:$0xff]
              %417 = vst [vmem:[%s377 + $0x98] sm:$0xff] %v416
              %v418 = vld [vmem:[%s376 + $0xa0] sm:$0xff]
              %419 = vst [vmem:[%s377 + $0xa0] sm:$0xff] %v418
              %v420 = vld [vmem:[%s376 + $0xa8] sm:$0xff]
              %421 = vst [vmem:[%s377 + $0xa8] sm:$0xff] %v420
              %v422 = vld [vmem:[%s376 + $0xb0] sm:$0xff]
              %423 = vst [vmem:[%s377 + $0xb0] sm:$0xff] %v422
              %v424 = vld [vmem:[%s376 + $0xb8] sm:$0xff]
              %425 = vst [vmem:[%s377 + $0xb8] sm:$0xff] %v424
              %v426 = vld [vmem:[%s376 + $0xc0] sm:$0xff]
              %427 = vst [vmem:[%s377 + $0xc0] sm:$0xff] %v426
              %v428 = vld [vmem:[%s376 + $0xc8] sm:$0xff]
              %429 = vst [vmem:[%s377 + $0xc8] sm:$0xff] %v428
              %v430 = vld [vmem:[%s376 + $0xd0] sm:$0xff]
              %431 = vst [vmem:[%s377 + $0xd0] sm:$0xff] %v430
              %v432 = vld [vmem:[%s376 + $0xd8] sm:$0xff]
              %433 = vst [vmem:[%s377 + $0xd8] sm:$0xff] %v432
              %v434 = vld [vmem:[%s376 + $0xe0] sm:$0xff]
              %435 = vst [vmem:[%s377 + $0xe0] sm:$0xff] %v434
              %v436 = vld [vmem:[%s376 + $0xe8] sm:$0xff]
              %437 = vst [vmem:[%s377 + $0xe8] sm:$0xff] %v436
              %v438 = vld [vmem:[%s376 + $0xf0] sm:$0xff]
              %439 = vst [vmem:[%s377 + $0xf0] sm:$0xff] %v438
              %v440 = vld [vmem:[%s376 + $0xf8] sm:$0xff]
              %441 = vst [vmem:[%s377 + $0xf8] sm:$0xff] %v440
              %v442 = vld [vmem:[%s376 + $0x100] sm:$0xff]
              %443 = vst [vmem:[%s377 + $0x100] sm:$0xff] %v442
              %v444 = vld [vmem:[%s376 + $0x108] sm:$0xff]
              %445 = vst [vmem:[%s377 + $0x108] sm:$0xff] %v444
              %v446 = vld [vmem:[%s376 + $0x110] sm:$0xff]
              %447 = vst [vmem:[%s377 + $0x110] sm:$0xff] %v446
              %v448 = vld [vmem:[%s376 + $0x118] sm:$0xff]
              %449 = vst [vmem:[%s377 + $0x118] sm:$0xff] %v448
              %v450 = vld [vmem:[%s376 + $0x120] sm:$0xff]
              %451 = vst [vmem:[%s377 + $0x120] sm:$0xff] %v450
              %v452 = vld [vmem:[%s376 + $0x128] sm:$0xff]
              %453 = vst [vmem:[%s377 + $0x128] sm:$0xff] %v452
              %v454 = vld [vmem:[%s376 + $0x130] sm:$0xff]
              %455 = vst [vmem:[%s377 + $0x130] sm:$0xff] %v454
              %v456 = vld [vmem:[%s376 + $0x138] sm:$0xff]
              %457 = vst [vmem:[%s377 + $0x138] sm:$0xff] %v456
              %v458 = vld [vmem:[%s376 + $0x140] sm:$0xff]
              %459 = vst [vmem:[%s377 + $0x140] sm:$0xff] %v458
              %v460 = vld [vmem:[%s376 + $0x148] sm:$0xff]
              %461 = vst [vmem:[%s377 + $0x148] sm:$0xff] %v460
              %v462 = vld [vmem:[%s376 + $0x150] sm:$0xff]
              %463 = vst [vmem:[%s377 + $0x150] sm:$0xff] %v462
              %v464 = vld [vmem:[%s376 + $0x158] sm:$0xff]
              %465 = vst [vmem:[%s377 + $0x158] sm:$0xff] %v464
              %v466 = vld [vmem:[%s376 + $0x160] sm:$0xff]
              %467 = vst [vmem:[%s377 + $0x160] sm:$0xff] %v466
              %v468 = vld [vmem:[%s376 + $0x168] sm:$0xff]
              %469 = vst [vmem:[%s377 + $0x168] sm:$0xff] %v468
              %v470 = vld [vmem:[%s376 + $0x170] sm:$0xff]
              %471 = vst [vmem:[%s377 + $0x170] sm:$0xff] %v470
              %v472 = vld [vmem:[%s376 + $0x178] sm:$0xff]
              %473 = vst [vmem:[%s377 + $0x178] sm:$0xff] %v472
              %v474 = vld [vmem:[%s376 + $0x180] sm:$0xff]
              %475 = vst [vmem:[%s377 + $0x180] sm:$0xff] %v474
              %v476 = vld [vmem:[%s376 + $0x188] sm:$0xff]
              %477 = vst [vmem:[%s377 + $0x188] sm:$0xff] %v476
              %v478 = vld [vmem:[%s376 + $0x190] sm:$0xff]
              %479 = vst [vmem:[%s377 + $0x190] sm:$0xff] %v478
              %v480 = vld [vmem:[%s376 + $0x198] sm:$0xff]
              %481 = vst [vmem:[%s377 + $0x198] sm:$0xff] %v480
              %v482 = vld [vmem:[%s376 + $0x1a0] sm:$0xff]
              %483 = vst [vmem:[%s377 + $0x1a0] sm:$0xff] %v482
              %v484 = vld [vmem:[%s376 + $0x1a8] sm:$0xff]
              %485 = vst [vmem:[%s377 + $0x1a8] sm:$0xff] %v484
              %v486 = vld [vmem:[%s376 + $0x1b0] sm:$0xff]
              %487 = vst [vmem:[%s377 + $0x1b0] sm:$0xff] %v486
              %v488 = vld [vmem:[%s376 + $0x1b8] sm:$0xff]
              %489 = vst [vmem:[%s377 + $0x1b8] sm:$0xff] %v488
              %v490 = vld [vmem:[%s376 + $0x1c0] sm:$0xff]
              %491 = vst [vmem:[%s377 + $0x1c0] sm:$0xff] %v490
              %v492 = vld [vmem:[%s376 + $0x1c8] sm:$0xff]
              %493 = vst [vmem:[%s377 + $0x1c8] sm:$0xff] %v492
              %v494 = vld [vmem:[%s376 + $0x1d0] sm:$0xff]
              %495 = vst [vmem:[%s377 + $0x1d0] sm:$0xff] %v494
              %v496 = vld [vmem:[%s376 + $0x1d8] sm:$0xff]
              %497 = vst [vmem:[%s377 + $0x1d8] sm:$0xff] %v496
              %v498 = vld [vmem:[%s376 + $0x1e0] sm:$0xff]
              %499 = vst [vmem:[%s377 + $0x1e0] sm:$0xff] %v498
              %v500 = vld [vmem:[%s376 + $0x1e8] sm:$0xff]
              %501 = vst [vmem:[%s377 + $0x1e8] sm:$0xff] %v500
              %v502 = vld [vmem:[%s376 + $0x1f0] sm:$0xff]
              %503 = vst [vmem:[%s377 + $0x1f0] sm:$0xff] %v502
              %v504 = vld [vmem:[%s376 + $0x1f8] sm:$0xff]
              %505 = vst [vmem:[%s377 + $0x1f8] sm:$0xff] %v504
              %v506 = vld [vmem:[%s376 + $0x200] sm:$0xff]
              %507 = vst [vmem:[%s377 + $0x200] sm:$0xff] %v506
              %v508 = vld [vmem:[%s376 + $0x208] sm:$0xff]
              %509 = vst [vmem:[%s377 + $0x208] sm:$0xff] %v508
              %v510 = vld [vmem:[%s376 + $0x210] sm:$0xff]
              %511 = vst [vmem:[%s377 + $0x210] sm:$0xff] %v510
              %v512 = vld [vmem:[%s376 + $0x218] sm:$0xff]
              %513 = vst [vmem:[%s377 + $0x218] sm:$0xff] %v512
              %v514 = vld [vmem:[%s376 + $0x220] sm:$0xff]
              %515 = vst [vmem:[%s377 + $0x220] sm:$0xff] %v514
              %v516 = vld [vmem:[%s376 + $0x228] sm:$0xff]
              %517 = vst [vmem:[%s377 + $0x228] sm:$0xff] %v516
              %v518 = vld [vmem:[%s376 + $0x230] sm:$0xff]
              %519 = vst [vmem:[%s377 + $0x230] sm:$0xff] %v518
              %v520 = vld [vmem:[%s376 + $0x238] sm:$0xff]
              %521 = vst [vmem:[%s377 + $0x238] sm:$0xff] %v520
              %v522 = vld [vmem:[%s376 + $0x240] sm:$0xff]
              %523 = vst [vmem:[%s377 + $0x240] sm:$0xff] %v522
              %v524 = vld [vmem:[%s376 + $0x248] sm:$0xff]
              %525 = vst [vmem:[%s377 + $0x248] sm:$0xff] %v524
              %v526 = vld [vmem:[%s376 + $0x250] sm:$0xff]
              %527 = vst [vmem:[%s377 + $0x250] sm:$0xff] %v526
              %v528 = vld [vmem:[%s376 + $0x258] sm:$0xff]
              %529 = vst [vmem:[%s377 + $0x258] sm:$0xff] %v528
              %v530 = vld [vmem:[%s376 + $0x260] sm:$0xff]
              %531 = vst [vmem:[%s377 + $0x260] sm:$0xff] %v530
              %v532 = vld [vmem:[%s376 + $0x268] sm:$0xff]
              %533 = vst [vmem:[%s377 + $0x268] sm:$0xff] %v532
              %v534 = vld [vmem:[%s376 + $0x270] sm:$0xff]
              %535 = vst [vmem:[%s377 + $0x270] sm:$0xff] %v534
              %v536 = vld [vmem:[%s376 + $0x278] sm:$0xff]
              %537 = vst [vmem:[%s377 + $0x278] sm:$0xff] %v536
              %v538 = vld [vmem:[%s376 + $0x280] sm:$0xff]
              %539 = vst [vmem:[%s377 + $0x280] sm:$0xff] %v538
              %v540 = vld [vmem:[%s376 + $0x288] sm:$0xff]
              %541 = vst [vmem:[%s377 + $0x288] sm:$0xff] %v540
              %v542 = vld [vmem:[%s376 + $0x290] sm:$0xff]
              %543 = vst [vmem:[%s377 + $0x290] sm:$0xff] %v542
              %v544 = vld [vmem:[%s376 + $0x298] sm:$0xff]
              %545 = vst [vmem:[%s377 + $0x298] sm:$0xff] %v544
              %v546 = vld [vmem:[%s376 + $0x2a0] sm:$0xff]
              %547 = vst [vmem:[%s377 + $0x2a0] sm:$0xff] %v546
              %v548 = vld [vmem:[%s376 + $0x2a8] sm:$0xff]
              %549 = vst [vmem:[%s377 + $0x2a8] sm:$0xff] %v548
              %v550 = vld [vmem:[%s376 + $0x2b0] sm:$0xff]
              %551 = vst [vmem:[%s377 + $0x2b0] sm:$0xff] %v550
              %v552 = vld [vmem:[%s376 + $0x2b8] sm:$0xff]
              %553 = vst [vmem:[%s377 + $0x2b8] sm:$0xff] %v552
              %v554 = vld [vmem:[%s376 + $0x2c0] sm:$0xff]
              %555 = vst [vmem:[%s377 + $0x2c0] sm:$0xff] %v554
              %v556 = vld [vmem:[%s376 + $0x2c8] sm:$0xff]
              %557 = vst [vmem:[%s377 + $0x2c8] sm:$0xff] %v556
              %v558 = vld [vmem:[%s376 + $0x2d0] sm:$0xff]
              %559 = vst [vmem:[%s377 + $0x2d0] sm:$0xff] %v558
              %v560 = vld [vmem:[%s376 + $0x2d8] sm:$0xff]
              %561 = vst [vmem:[%s377 + $0x2d8] sm:$0xff] %v560
              %v562 = vld [vmem:[%s376 + $0x2e0] sm:$0xff]
              %563 = vst [vmem:[%s377 + $0x2e0] sm:$0xff] %v562
              %v564 = vld [vmem:[%s376 + $0x2e8] sm:$0xff]
              %565 = vst [vmem:[%s377 + $0x2e8] sm:$0xff] %v564
              %v566 = vld [vmem:[%s376 + $0x2f0] sm:$0xff]
              %567 = vst [vmem:[%s377 + $0x2f0] sm:$0xff] %v566
              %v568 = vld [vmem:[%s376 + $0x2f8] sm:$0xff]
              %569 = vst [vmem:[%s377 + $0x2f8] sm:$0xff] %v568
              %v570 = vld [vmem:[%s376 + $0x300] sm:$0xff]
              %571 = vst [vmem:[%s377 + $0x300] sm:$0xff] %v570
              %v572 = vld [vmem:[%s376 + $0x308] sm:$0xff]
              %573 = vst [vmem:[%s377 + $0x308] sm:$0xff] %v572
              %v574 = vld [vmem:[%s376 + $0x310] sm:$0xff]
              %575 = vst [vmem:[%s377 + $0x310] sm:$0xff] %v574
              %v576 = vld [vmem:[%s376 + $0x318] sm:$0xff]
              %577 = vst [vmem:[%s377 + $0x318] sm:$0xff] %v576
              %v578 = vld [vmem:[%s376 + $0x320] sm:$0xff]
              %579 = vst [vmem:[%s377 + $0x320] sm:$0xff] %v578
              %v580 = vld [vmem:[%s376 + $0x328] sm:$0xff]
              %581 = vst [vmem:[%s377 + $0x328] sm:$0xff] %v580
              %v582 = vld [vmem:[%s376 + $0x330] sm:$0xff]
              %583 = vst [vmem:[%s377 + $0x330] sm:$0xff] %v582
              %v584 = vld [vmem:[%s376 + $0x338] sm:$0xff]
              %585 = vst [vmem:[%s377 + $0x338] sm:$0xff] %v584
              %v586 = vld [vmem:[%s376 + $0x340] sm:$0xff]
              %587 = vst [vmem:[%s377 + $0x340] sm:$0xff] %v586
              %v588 = vld [vmem:[%s376 + $0x348] sm:$0xff]
              %589 = vst [vmem:[%s377 + $0x348] sm:$0xff] %v588
              %v590 = vld [vmem:[%s376 + $0x350] sm:$0xff]
              %591 = vst [vmem:[%s377 + $0x350] sm:$0xff] %v590
              %v592 = vld [vmem:[%s376 + $0x358] sm:$0xff]
              %593 = vst [vmem:[%s377 + $0x358] sm:$0xff] %v592
              %v594 = vld [vmem:[%s376 + $0x360] sm:$0xff]
              %595 = vst [vmem:[%s377 + $0x360] sm:$0xff] %v594
              %v596 = vld [vmem:[%s376 + $0x368] sm:$0xff]
              %597 = vst [vmem:[%s377 + $0x368] sm:$0xff] %v596
              %v598 = vld [vmem:[%s376 + $0x370] sm:$0xff]
              %599 = vst [vmem:[%s377 + $0x370] sm:$0xff] %v598
              %v600 = vld [vmem:[%s376 + $0x378] sm:$0xff]
              %601 = vst [vmem:[%s377 + $0x378] sm:$0xff] %v600
              %v602 = vld [vmem:[%s376 + $0x380] sm:$0xff]
              %603 = vst [vmem:[%s377 + $0x380] sm:$0xff] %v602
              %v604 = vld [vmem:[%s376 + $0x388] sm:$0xff]
              %605 = vst [vmem:[%s377 + $0x388] sm:$0xff] %v604
              %v606 = vld [vmem:[%s376 + $0x390] sm:$0xff]
              %607 = vst [vmem:[%s377 + $0x390] sm:$0xff] %v606
              %v608 = vld [vmem:[%s376 + $0x398] sm:$0xff]
              %609 = vst [vmem:[%s377 + $0x398] sm:$0xff] %v608
              %v610 = vld [vmem:[%s376 + $0x3a0] sm:$0xff]
              %611 = vst [vmem:[%s377 + $0x3a0] sm:$0xff] %v610
              %v612 = vld [vmem:[%s376 + $0x3a8] sm:$0xff]
              %613 = vst [vmem:[%s377 + $0x3a8] sm:$0xff] %v612
              %v614 = vld [vmem:[%s376 + $0x3b0] sm:$0xff]
              %615 = vst [vmem:[%s377 + $0x3b0] sm:$0xff] %v614
              %v616 = vld [vmem:[%s376 + $0x3b8] sm:$0xff]
              %617 = vst [vmem:[%s377 + $0x3b8] sm:$0xff] %v616
              %v618 = vld [vmem:[%s376 + $0x3c0] sm:$0xff]
              %619 = vst [vmem:[%s377 + $0x3c0] sm:$0xff] %v618
              %v620 = vld [vmem:[%s376 + $0x3c8] sm:$0xff]
              %621 = vst [vmem:[%s377 + $0x3c8] sm:$0xff] %v620
              %v622 = vld [vmem:[%s376 + $0x3d0] sm:$0xff]
              %623 = vst [vmem:[%s377 + $0x3d0] sm:$0xff] %v622
              %v624 = vld [vmem:[%s376 + $0x3d8] sm:$0xff]
              %625 = vst [vmem:[%s377 + $0x3d8] sm:$0xff] %v624
              %v626 = vld [vmem:[%s376 + $0x3e0] sm:$0xff]
              %627 = vst [vmem:[%s377 + $0x3e0] sm:$0xff] %v626
              %v628 = vld [vmem:[%s376 + $0x3e8] sm:$0xff]
              %629 = vst [vmem:[%s377 + $0x3e8] sm:$0xff] %v628
              %v630 = vld [vmem:[%s376 + $0x3f0] sm:$0xff]
              %631 = vst [vmem:[%s377 + $0x3f0] sm:$0xff] %v630
              %v632 = vld [vmem:[%s376 + $0x3f8] sm:$0xff]
              %633 = vst [vmem:[%s377 + $0x3f8] sm:$0xff] %v632
            $region54: #{encoder_forward.2} parent=48 // loop_footer
              %s375 = sadd.s32 1, %s371
            $region55: #{encoder_forward.2} parent=48 // loop_footer_branch
              %370 = sbr.rel target = $region51
            $region56: #{encoder_forward.2} parent=48 // loop_exit
              _
          $region49: #{encoder_forward.2} parent=45 // pred_fallthru
            _
          // Predicated region
          $region57: #{encoder_forward.2} parent=45 // pred_check
            _
          $region58: #{encoder_forward.2} parent=45 // pred_check_branch
            %635 = sbr.rel target = $region60
          $region59: #{encoder_forward.2} parent=45 // pred_region
            _
          $region60: #{encoder_forward.2} parent=45 // pred_fallthru
            _
          // Predicated region
          $region61: #{encoder_forward.2} parent=45 // pred_check
            _
          $region62: #{encoder_forward.2} parent=45 // pred_check_branch
            %638 = sbr.rel (0) target = $region64
          $region63: #{encoder_forward.2} parent=45 // pred_region
            %639 = vsyncadd [#allocation7], 16384
          $region64: #{encoder_forward.2} parent=45 // pred_fallthru
            _
          %s640 = smul.u32 8, 2
          %s641 = smul.u32 %s640, 16
          %s642 = smul.u32 %s641, 4
          %s643 = sshll.u32 %s642, 4
          %644 = dma.done [#allocation7], %s643
        %645 = vst [vmem:[#allocation3] sm:$0x3] 0.0
        %646 = vst [vmem:[#allocation4] sm:$0x3] 0.0
        %647 = vst [vmem:[#allocation5] sm:$0x3] 0.0
        %648 = vst [vmem:[#allocation6] sm:$0x3] 0.0
      $region44: #{encoder_forward.2} parent=39 // pred_fallthru
        _
      %v649 = vld [vmem:[#allocation2] sm:$0xff]
      %v650 = vld [vmem:[#allocation2 + $0x8] sm:$0xff]
      %v651 = vld [vmem:[#allocation2 + $0x10] sm:$0xff]
      %v652 = vld [vmem:[#allocation2 + $0x18] sm:$0xff]
      %v653 = vld [vmem:[#allocation2 + $0x20] sm:$0xff]
      %v654 = vld [vmem:[#allocation2 + $0x28] sm:$0xff]
      %v655 = vld [vmem:[#allocation2 + $0x30] sm:$0xff]
      %v656 = vld [vmem:[#allocation2 + $0x38] sm:$0xff]
      %v657 = vld [vmem:[#allocation2 + $0x40] sm:$0xff]
      %v658 = vld [vmem:[#allocation2 + $0x48] sm:$0xff]
      %v659 = vld [vmem:[#allocation2 + $0x50] sm:$0xff]
      %v660 = vld [vmem:[#allocation2 + $0x58] sm:$0xff]
      %v661 = vld [vmem:[#allocation2 + $0x60] sm:$0xff]
      %v662 = vld [vmem:[#allocation2 + $0x68] sm:$0xff]
      %v663 = vld [vmem:[#allocation2 + $0x70] sm:$0xff]
      %v664 = vld [vmem:[#allocation2 + $0x78] sm:$0xff]
      %v665 = vld [vmem:[#allocation2 + $0x80] sm:$0xff]
      %v666 = vld [vmem:[#allocation2 + $0x88] sm:$0xff]
      %v667 = vld [vmem:[#allocation2 + $0x90] sm:$0xff]
      %v668 = vld [vmem:[#allocation2 + $0x98] sm:$0xff]
      %v669 = vld [vmem:[#allocation2 + $0xa0] sm:$0xff]
      %v670 = vld [vmem:[#allocation2 + $0xa8] sm:$0xff]
      %v671 = vld [vmem:[#allocation2 + $0xb0] sm:$0xff]
      %v672 = vld [vmem:[#allocation2 + $0xb8] sm:$0xff]
      %v673 = vld [vmem:[#allocation2 + $0xc0] sm:$0xff]
      %v674 = vld [vmem:[#allocation2 + $0xc8] sm:$0xff]
      %v675 = vld [vmem:[#allocation2 + $0xd0] sm:$0xff]
      %v676 = vld [vmem:[#allocation2 + $0xd8] sm:$0xff]
      %v677 = vld [vmem:[#allocation2 + $0xe0] sm:$0xff]
      %v678 = vld [vmem:[#allocation2 + $0xe8] sm:$0xff]
      %v679 = vld [vmem:[#allocation2 + $0xf0] sm:$0xff]
      %v680 = vld [vmem:[#allocation2 + $0xf8] sm:$0xff]
      %v681 = vld [vmem:[#allocation2 + $0x100] sm:$0xff]
      %v682 = vld [vmem:[#allocation2 + $0x108] sm:$0xff]
      %v683 = vld [vmem:[#allocation2 + $0x110] sm:$0xff]
      %v684 = vld [vmem:[#allocation2 + $0x118] sm:$0xff]
      %v685 = vld [vmem:[#allocation2 + $0x120] sm:$0xff]
      %v686 = vld [vmem:[#allocation2 + $0x128] sm:$0xff]
      %v687 = vld [vmem:[#allocation2 + $0x130] sm:$0xff]
      %v688 = vld [vmem:[#allocation2 + $0x138] sm:$0xff]
      %v689 = vld [vmem:[#allocation2 + $0x140] sm:$0xff]
      %v690 = vld [vmem:[#allocation2 + $0x148] sm:$0xff]
      %v691 = vld [vmem:[#allocation2 + $0x150] sm:$0xff]
      %v692 = vld [vmem:[#allocation2 + $0x158] sm:$0xff]
      %v693 = vld [vmem:[#allocation2 + $0x160] sm:$0xff]
      %v694 = vld [vmem:[#allocation2 + $0x168] sm:$0xff]
      %v695 = vld [vmem:[#allocation2 + $0x170] sm:$0xff]
      %v696 = vld [vmem:[#allocation2 + $0x178] sm:$0xff]
      %v697 = vld [vmem:[#allocation2 + $0x180] sm:$0xff]
      %v698 = vld [vmem:[#allocation2 + $0x188] sm:$0xff]
      %v699 = vld [vmem:[#allocation2 + $0x190] sm:$0xff]
      %v700 = vld [vmem:[#allocation2 + $0x198] sm:$0xff]
      %v701 = vld [vmem:[#allocation2 + $0x1a0] sm:$0xff]
      %v702 = vld [vmem:[#allocation2 + $0x1a8] sm:$0xff]
      %v703 = vld [vmem:[#allocation2 + $0x1b0] sm:$0xff]
      %v704 = vld [vmem:[#allocation2 + $0x1b8] sm:$0xff]
      %v705 = vld [vmem:[#allocation2 + $0x1c0] sm:$0xff]
      %v706 = vld [vmem:[#allocation2 + $0x1c8] sm:$0xff]
      %v707 = vld [vmem:[#allocation2 + $0x1d0] sm:$0xff]
      %v708 = vld [vmem:[#allocation2 + $0x1d8] sm:$0xff]
      %v709 = vld [vmem:[#allocation2 + $0x1e0] sm:$0xff]
      %v710 = vld [vmem:[#allocation2 + $0x1e8] sm:$0xff]
      %v711 = vld [vmem:[#allocation2 + $0x1f0] sm:$0xff]
      %v712 = vld [vmem:[#allocation2 + $0x1f8] sm:$0xff]
      %s713 = scalar_lea.vmem [#allocation2], 512
      %v714 = vld [vmem:[%s713] sm:$0xff]
      %v715 = vld [vmem:[%s713 + $0x8] sm:$0xff]
      %v716 = vld [vmem:[%s713 + $0x10] sm:$0xff]
      %v717 = vld [vmem:[%s713 + $0x18] sm:$0xff]
      %v718 = vld [vmem:[%s713 + $0x20] sm:$0xff]
      %v719 = vld [vmem:[%s713 + $0x28] sm:$0xff]
      %v720 = vld [vmem:[%s713 + $0x30] sm:$0xff]
      %v721 = vld [vmem:[%s713 + $0x38] sm:$0xff]
      %v722 = vld [vmem:[%s713 + $0x40] sm:$0xff]
      %v723 = vld [vmem:[%s713 + $0x48] sm:$0xff]
      %v724 = vld [vmem:[%s713 + $0x50] sm:$0xff]
      %v725 = vld [vmem:[%s713 + $0x58] sm:$0xff]
      %v726 = vld [vmem:[%s713 + $0x60] sm:$0xff]
      %v727 = vld [vmem:[%s713 + $0x68] sm:$0xff]
      %v728 = vld [vmem:[%s713 + $0x70] sm:$0xff]
      %v729 = vld [vmem:[%s713 + $0x78] sm:$0xff]
      %v730 = vld [vmem:[%s713 + $0x80] sm:$0xff]
      %v731 = vld [vmem:[%s713 + $0x88] sm:$0xff]
      %v732 = vld [vmem:[%s713 + $0x90] sm:$0xff]
      %v733 = vld [vmem:[%s713 + $0x98] sm:$0xff]
      %v734 = vld [vmem:[%s713 + $0xa0] sm:$0xff]
      %v735 = vld [vmem:[%s713 + $0xa8] sm:$0xff]
      %v736 = vld [vmem:[%s713 + $0xb0] sm:$0xff]
      %v737 = vld [vmem:[%s713 + $0xb8] sm:$0xff]
      %v738 = vld [vmem:[%s713 + $0xc0] sm:$0xff]
      %v739 = vld [vmem:[%s713 + $0xc8] sm:$0xff]
      %v740 = vld [vmem:[%s713 + $0xd0] sm:$0xff]
      %v741 = vld [vmem:[%s713 + $0xd8] sm:$0xff]
      %v742 = vld [vmem:[%s713 + $0xe0] sm:$0xff]
      %v743 = vld [vmem:[%s713 + $0xe8] sm:$0xff]
      %v744 = vld [vmem:[%s713 + $0xf0] sm:$0xff]
      %v745 = vld [vmem:[%s713 + $0xf8] sm:$0xff]
      %v746 = vld [vmem:[%s713 + $0x100] sm:$0xff]
      %v747 = vld [vmem:[%s713 + $0x108] sm:$0xff]
      %v748 = vld [vmem:[%s713 + $0x110] sm:$0xff]
      %v749 = vld [vmem:[%s713 + $0x118] sm:$0xff]
      %v750 = vld [vmem:[%s713 + $0x120] sm:$0xff]
      %v751 = vld [vmem:[%s713 + $0x128] sm:$0xff]
      %v752 = vld [vmem:[%s713 + $0x130] sm:$0xff]
      %v753 = vld [vmem:[%s713 + $0x138] sm:$0xff]
      %v754 = vld [vmem:[%s713 + $0x140] sm:$0xff]
      %v755 = vld [vmem:[%s713 + $0x148] sm:$0xff]
      %v756 = vld [vmem:[%s713 + $0x150] sm:$0xff]
      %v757 = vld [vmem:[%s713 + $0x158] sm:$0xff]
      %v758 = vld [vmem:[%s713 + $0x160] sm:$0xff]
      %v759 = vld [vmem:[%s713 + $0x168] sm:$0xff]
      %v760 = vld [vmem:[%s713 + $0x170] sm:$0xff]
      %v761 = vld [vmem:[%s713 + $0x178] sm:$0xff]
      %v762 = vld [vmem:[%s713 + $0x180] sm:$0xff]
      %v763 = vld [vmem:[%s713 + $0x188] sm:$0xff]
      %v764 = vld [vmem:[%s713 + $0x190] sm:$0xff]
      %v765 = vld [vmem:[%s713 + $0x198] sm:$0xff]
      %v766 = vld [vmem:[%s713 + $0x1a0] sm:$0xff]
      %v767 = vld [vmem:[%s713 + $0x1a8] sm:$0xff]
      %v768 = vld [vmem:[%s713 + $0x1b0] sm:$0xff]
      %v769 = vld [vmem:[%s713 + $0x1b8] sm:$0xff]
      %v770 = vld [vmem:[%s713 + $0x1c0] sm:$0xff]
      %v771 = vld [vmem:[%s713 + $0x1c8] sm:$0xff]
      %v772 = vld [vmem:[%s713 + $0x1d0] sm:$0xff]
      %v773 = vld [vmem:[%s713 + $0x1d8] sm:$0xff]
      %v774 = vld [vmem:[%s713 + $0x1e0] sm:$0xff]
      %v775 = vld [vmem:[%s713 + $0x1e8] sm:$0xff]
      %v776 = vld [vmem:[%s713 + $0x1f0] sm:$0xff]
      %v777 = vld [vmem:[%s713 + $0x1f8] sm:$0xff]
      %v778 = vld [vmem:[%s5] sm:$0xff]
      %v779 = vld [vmem:[#allocation3] sm:$0x3]
      %v780 = vld [vmem:[#allocation4] sm:$0x3]
      %v781 = vld [vmem:[#allocation5] sm:$0x3]
      %v782 = vld [vmem:[#allocation6] sm:$0x3]
      %v783 = vld [vmem:[%s324] sm:$0xff]
      %v784 = vld [vmem:[%s340] sm:$0x3]
      %785 = vmatpush.msra.mxu0 %v709
      %786 = vmatpush.msra.mxu0 %v705
      %787 = vmatpush.msra.mxu0 %v701
      %788 = vmatpush.msra.mxu0 %v697
      %789 = vmatpush.msra.mxu0 %v693
      %790 = vmatpush.msra.mxu0 %v689
      %791 = vmatpush.msra.mxu0 %v685
      %792 = vmatpush.msra.mxu0 %v681
      %793 = vmatpush.msra.mxu0 %v677
      %794 = vmatpush.msra.mxu0 %v673
      %795 = vmatpush.msra.mxu0 %v669
      %796 = vmatpush.msra.mxu0 %v665
      %797 = vmatpush.msra.mxu0 %v661
      %798 = vmatpush.msra.mxu0 %v657
      %799 = vmatpush.msra.mxu0 %v653
      %800 = vmatpush.msra.mxu0 %v649
      %801 = vmatmul.f32.gmra.mxu0 %v779
      %v802 = vpop.f32.mrf.mxu0
      %v803 = vadd.f32 0.0, %v802
      %804 = vdwg.mxu0
      %805 = vmatpush.msra.mxu0 %v710
      %806 = vmatpush.msra.mxu0 %v706
      %807 = vmatpush.msra.mxu0 %v702
      %808 = vmatpush.msra.mxu0 %v698
      %809 = vmatpush.msra.mxu0 %v694
      %810 = vmatpush.msra.mxu0 %v690
      %811 = vmatpush.msra.mxu0 %v686
      %812 = vmatpush.msra.mxu0 %v682
      %813 = vmatpush.msra.mxu0 %v678
      %814 = vmatpush.msra.mxu0 %v674
      %815 = vmatpush.msra.mxu0 %v670
      %816 = vmatpush.msra.mxu0 %v666
      %817 = vmatpush.msra.mxu0 %v662
      %818 = vmatpush.msra.mxu0 %v658
      %819 = vmatpush.msra.mxu0 %v654
      %820 = vmatpush.msra.mxu0 %v650
      %821 = vmatmul.f32.gmra.mxu0 %v779
      %v822 = vpop.f32.mrf.mxu0
      %v823 = vadd.f32 0.0, %v822
      %824 = vdwg.mxu0
      %825 = vmatpush.msra.mxu0 %v711
      %826 = vmatpush.msra.mxu0 %v707
      %827 = vmatpush.msra.mxu0 %v703
      %828 = vmatpush.msra.mxu0 %v699
      %829 = vmatpush.msra.mxu0 %v695
      %830 = vmatpush.msra.mxu0 %v691
      %831 = vmatpush.msra.mxu0 %v687
      %832 = vmatpush.msra.mxu0 %v683
      %833 = vmatpush.msra.mxu0 %v679
      %834 = vmatpush.msra.mxu0 %v675
      %835 = vmatpush.msra.mxu0 %v671
      %836 = vmatpush.msra.mxu0 %v667
      %837 = vmatpush.msra.mxu0 %v663
      %838 = vmatpush.msra.mxu0 %v659
      %839 = vmatpush.msra.mxu0 %v655
      %840 = vmatpush.msra.mxu0 %v651
      %841 = vmatmul.f32.gmra.mxu0 %v779
      %v842 = vpop.f32.mrf.mxu0
      %v843 = vadd.f32 0.0, %v842
      %844 = vdwg.mxu0
      %845 = vmatpush.msra.mxu0 %v712
      %846 = vmatpush.msra.mxu0 %v708
      %847 = vmatpush.msra.mxu0 %v704
      %848 = vmatpush.msra.mxu0 %v700
      %849 = vmatpush.msra.mxu0 %v696
      %850 = vmatpush.msra.mxu0 %v692
      %851 = vmatpush.msra.mxu0 %v688
      %852 = vmatpush.msra.mxu0 %v684
      %853 = vmatpush.msra.mxu0 %v680
      %854 = vmatpush.msra.mxu0 %v676
      %855 = vmatpush.msra.mxu0 %v672
      %856 = vmatpush.msra.mxu0 %v668
      %857 = vmatpush.msra.mxu0 %v664
      %858 = vmatpush.msra.mxu0 %v660
      %859 = vmatpush.msra.mxu0 %v656
      %860 = vmatpush.msra.mxu0 %v652
      %861 = vmatmul.f32.gmra.mxu0 %v779
      %v862 = vpop.f32.mrf.mxu0
      %v863 = vadd.f32 0.0, %v862
      %864 = vdwg.mxu0
      %v869 = vrot.slane %v823, 6
      %v870 = vrot.slane %v843, 4
      %v871 = vrot.slane %v863, 2
      %vm872 = vcmask 1041408
      %v873 = vsel %vm872, %v803, %v869
      %vm874 = vcmask 1045508
      %v875 = vsel %vm874, %v870, %v871
      %vm876 = vcmask 1043456
      %v877 = vsel %vm876, %v873, %v875
      %v879 = vadd.f32 %v783, %v877
      %v881 = vperm.slane %v778, 0
      %v882 = vperm.slane %v778, 2
      %v883 = vperm.slane %v778, 4
      %v884 = vperm.slane %v778, 6
      %v889 = vperm.slane %v881, 0
      %v890 = vperm.slane %v882, 0
      %v891 = vperm.slane %v883, 0
      %v892 = vperm.slane %v884, 0
      %v897 = vrot.slane %v890, 6
      %v898 = vrot.slane %v891, 4
      %v899 = vrot.slane %v892, 2
      %v900 = vsel %vm872, %v889, %v897
      %v901 = vsel %vm874, %v898, %v899
      %v902 = vsel %vm876, %v900, %v901
      %v904 = vadd.f32 %v879, %v902
      %v905 = vmul.f32 %v904, 0.5
      %v906 = vtanh.pop %v905
      %v907 = vmul.f32 %v906, 0.5
      %v908 = vadd.f32 %v907, 0.5
      %v910 = vrot.slane %v904, 2
      %v912 = vmul.f32 %v910, 0.5
      %v913 = vtanh.pop %v912
      %v914 = vmul.f32 %v913, 0.5
      %v915 = vadd.f32 %v914, 0.5
      %v916 = vrot.slane %v904, 4
      %v918 = vtanh.pop %v916
      %v919 = vrot.slane %v904, 6
      %v921 = vmul.f32 %v919, 0.5
      %v922 = vtanh.pop %v921
      %v923 = vmul.f32 %v922, 0.5
      %v924 = vadd.f32 %v923, 0.5
      %v925 = vmul.f32 %v915, %v780
      %v926 = vmul.f32 %v908, %v918
      %v927 = vadd.f32 %v925, %v926
      %v928 = vtanh.pop %v927
      %v929 = vmul.f32 %v924, %v928
      %931 = vset.pattern.permute.xlu0 0
      %932 = vperm.xlu0 %931, %v784
      %v933 = vpop.permute.xlu0 %932
      %v935 = vmul.f32 %v929, %v933
      %v936 = vmul.f32 %v927, %v933
      %937 = vst [vmem:[%s354] sm:$0x3] %v935
      %s938 = scalar_lea.vmem %s333, 24
      %v939 = vld [vmem:[%s938] sm:$0xff]
      %s940 = scalar_lea.vmem %s347, 6
      %v941 = vld [vmem:[%s940] sm:$0x3]
      %942 = vmatpush.msra.mxu0 %v774
      %943 = vmatpush.msra.mxu0 %v770
      %944 = vmatpush.msra.mxu0 %v766
      %945 = vmatpush.msra.mxu0 %v762
      %946 = vmatpush.msra.mxu0 %v758
      %947 = vmatpush.msra.mxu0 %v754
      %948 = vmatpush.msra.mxu0 %v750
      %949 = vmatpush.msra.mxu0 %v746
      %950 = vmatpush.msra.mxu0 %v742
      %951 = vmatpush.msra.mxu0 %v738
      %952 = vmatpush.msra.mxu0 %v734
      %953 = vmatpush.msra.mxu0 %v730
      %954 = vmatpush.msra.mxu0 %v726
      %955 = vmatpush.msra.mxu0 %v722
      %956 = vmatpush.msra.mxu0 %v718
      %957 = vmatpush.msra.mxu0 %v714
      %958 = vmatmul.f32.gmra.mxu0 %v781
      %v959 = vpop.f32.mrf.mxu0
      %v960 = vadd.f32 0.0, %v959
      %961 = vdwg.mxu0
      %962 = vmatpush.msra.mxu0 %v775
      %963 = vmatpush.msra.mxu0 %v771
      %964 = vmatpush.msra.mxu0 %v767
      %965 = vmatpush.msra.mxu0 %v763
      %966 = vmatpush.msra.mxu0 %v759
      %967 = vmatpush.msra.mxu0 %v755
      %968 = vmatpush.msra.mxu0 %v751
      %969 = vmatpush.msra.mxu0 %v747
      %970 = vmatpush.msra.mxu0 %v743
      %971 = vmatpush.msra.mxu0 %v739
      %972 = vmatpush.msra.mxu0 %v735
      %973 = vmatpush.msra.mxu0 %v731
      %974 = vmatpush.msra.mxu0 %v727
      %975 = vmatpush.msra.mxu0 %v723
      %976 = vmatpush.msra.mxu0 %v719
      %977 = vmatpush.msra.mxu0 %v715
      %978 = vmatmul.f32.gmra.mxu0 %v781
      %v979 = vpop.f32.mrf.mxu0
      %v980 = vadd.f32 0.0, %v979
      %981 = vdwg.mxu0
      %982 = vmatpush.msra.mxu0 %v776
      %983 = vmatpush.msra.mxu0 %v772
      %984 = vmatpush.msra.mxu0 %v768
      %985 = vmatpush.msra.mxu0 %v764
      %986 = vmatpush.msra.mxu0 %v760
      %987 = vmatpush.msra.mxu0 %v756
      %988 = vmatpush.msra.mxu0 %v752
      %989 = vmatpush.msra.mxu0 %v748
      %990 = vmatpush.msra.mxu0 %v744
      %991 = vmatpush.msra.mxu0 %v740
      %992 = vmatpush.msra.mxu0 %v736
      %993 = vmatpush.msra.mxu0 %v732
      %994 = vmatpush.msra.mxu0 %v728
      %995 = vmatpush.msra.mxu0 %v724
      %996 = vmatpush.msra.mxu0 %v720
      %997 = vmatpush.msra.mxu0 %v716
      %998 = vmatmul.f32.gmra.mxu0 %v781
      %v999 = vpop.f32.mrf.mxu0
      %v1000 = vadd.f32 0.0, %v999
      %1001 = vdwg.mxu0
      %1002 = vmatpush.msra.mxu0 %v777
      %1003 = vmatpush.msra.mxu0 %v773
      %1004 = vmatpush.msra.mxu0 %v769
      %1005 = vmatpush.msra.mxu0 %v765
      %1006 = vmatpush.msra.mxu0 %v761
      %1007 = vmatpush.msra.mxu0 %v757
      %1008 = vmatpush.msra.mxu0 %v753
      %1009 = vmatpush.msra.mxu0 %v749
      %1010 = vmatpush.msra.mxu0 %v745
      %1011 = vmatpush.msra.mxu0 %v741
      %1012 = vmatpush.msra.mxu0 %v737
      %1013 = vmatpush.msra.mxu0 %v733
      %1014 = vmatpush.msra.mxu0 %v729
      %1015 = vmatpush.msra.mxu0 %v725
      %1016 = vmatpush.msra.mxu0 %v721
      %1017 = vmatpush.msra.mxu0 %v717
      %1018 = vmatmul.f32.gmra.mxu0 %v781
      %v1019 = vpop.f32.mrf.mxu0
      %v1020 = vadd.f32 0.0, %v1019
      %1021 = vdwg.mxu0
      %v1026 = vrot.slane %v980, 6
      %v1027 = vrot.slane %v1000, 4
      %v1028 = vrot.slane %v1020, 2
      %v1029 = vsel %vm872, %v960, %v1026
      %v1030 = vsel %vm874, %v1027, %v1028
      %v1031 = vsel %vm876, %v1029, %v1030
      %v1033 = vadd.f32 %v939, %v1031
      %v1034 = vperm.slane %v778, 1
      %v1035 = vperm.slane %v778, 3
      %v1036 = vperm.slane %v778, 5
      %v1037 = vperm.slane %v778, 7
      %v1042 = vperm.slane %v1034, 1
      %v1043 = vperm.slane %v1035, 1
      %v1044 = vperm.slane %v1036, 1
      %v1045 = vperm.slane %v1037, 1
      %v1050 = vrot.slane %v1043, 6
      %v1051 = vrot.slane %v1044, 4
      %v1052 = vrot.slane %v1045, 2
      %v1053 = vsel %vm872, %v1042, %v1050
      %v1054 = vsel %vm874, %v1051, %v1052
      %v1055 = vsel %vm876, %v1053, %v1054
      %v1057 = vadd.f32 %v1033, %v1055
      %v1058 = vmul.f32 %v1057, 0.5
      %v1059 = vtanh.pop %v1058
      %v1060 = vmul.f32 %v1059, 0.5
      %v1061 = vadd.f32 %v1060, 0.5
      %v1063 = vrot.slane %v1057, 2
      %v1065 = vmul.f32 %v1063, 0.5
      %v1066 = vtanh.pop %v1065
      %v1067 = vmul.f32 %v1066, 0.5
      %v1068 = vadd.f32 %v1067, 0.5
      %v1069 = vrot.slane %v1057, 4
      %v1071 = vtanh.pop %v1069
      %v1072 = vrot.slane %v1057, 6
      %v1074 = vmul.f32 %v1072, 0.5
      %v1075 = vtanh.pop %v1074
      %v1076 = vmul.f32 %v1075, 0.5
      %v1077 = vadd.f32 %v1076, 0.5
      %v1078 = vmul.f32 %v1068, %v782
      %v1079 = vmul.f32 %v1061, %v1071
      %v1080 = vadd.f32 %v1078, %v1079
      %v1081 = vtanh.pop %v1080
      %v1082 = vmul.f32 %v1077, %v1081
      %1084 = vset.pattern.permute.xlu0 0
      %1085 = vperm.xlu0 %1084, %v941
      %v1086 = vpop.permute.xlu0 %1085
      %v1088 = vmul.f32 %v1082, %v1086
      %v1089 = vmul.f32 %v1080, %v1086
      %s1090 = scalar_lea.vmem %s361, 6
      %1091 = vst [vmem:[%s1090] sm:$0x3] %v1088
      %s1092 = scalar_lea.vmem %s324, 8
      %v1093 = vld [vmem:[%s1092] sm:$0xff]
      %s1094 = scalar_lea.vmem %s340, 2
      %v1095 = vld [vmem:[%s1094] sm:$0x3]
      %1096 = vmatpush.msra.mxu0 %v709
      %1097 = vmatpush.msra.mxu0 %v705
      %1098 = vmatpush.msra.mxu0 %v701
      %1099 = vmatpush.msra.mxu0 %v697
      %1100 = vmatpush.msra.mxu0 %v693
      %1101 = vmatpush.msra.mxu0 %v689
      %1102 = vmatpush.msra.mxu0 %v685
      %1103 = vmatpush.msra.mxu0 %v681
      %1104 = vmatpush.msra.mxu0 %v677
      %1105 = vmatpush.msra.mxu0 %v673
      %1106 = vmatpush.msra.mxu0 %v669
      %1107 = vmatpush.msra.mxu0 %v665
      %1108 = vmatpush.msra.mxu0 %v661
      %1109 = vmatpush.msra.mxu0 %v657
      %1110 = vmatpush.msra.mxu0 %v653
      %1111 = vmatpush.msra.mxu0 %v649
      %1112 = vmatmul.f32.gmra.mxu0 %v935
      %v1113 = vpop.f32.mrf.mxu0
      %v1114 = vadd.f32 0.0, %v1113
      %1115 = vdwg.mxu0
      %1116 = vmatpush.msra.mxu0 %v710
      %1117 = vmatpush.msra.mxu0 %v706
      %1118 = vmatpush.msra.mxu0 %v702
      %1119 = vmatpush.msra.mxu0 %v698
      %1120 = vmatpush.msra.mxu0 %v694
      %1121 = vmatpush.msra.mxu0 %v690
      %1122 = vmatpush.msra.mxu0 %v686
      %1123 = vmatpush.msra.mxu0 %v682
      %1124 = vmatpush.msra.mxu0 %v678
      %1125 = vmatpush.msra.mxu0 %v674
      %1126 = vmatpush.msra.mxu0 %v670
      %1127 = vmatpush.msra.mxu0 %v666
      %1128 = vmatpush.msra.mxu0 %v662
      %1129 = vmatpush.msra.mxu0 %v658
      %1130 = vmatpush.msra.mxu0 %v654
      %1131 = vmatpush.msra.mxu0 %v650
      %1132 = vmatmul.f32.gmra.mxu0 %v935
      %v1133 = vpop.f32.mrf.mxu0
      %v1134 = vadd.f32 0.0, %v1133
      %1135 = vdwg.mxu0
      %1136 = vmatpush.msra.mxu0 %v711
      %1137 = vmatpush.msra.mxu0 %v707
      %1138 = vmatpush.msra.mxu0 %v703
      %1139 = vmatpush.msra.mxu0 %v699
      %1140 = vmatpush.msra.mxu0 %v695
      %1141 = vmatpush.msra.mxu0 %v691
      %1142 = vmatpush.msra.mxu0 %v687
      %1143 = vmatpush.msra.mxu0 %v683
      %1144 = vmatpush.msra.mxu0 %v679
      %1145 = vmatpush.msra.mxu0 %v675
      %1146 = vmatpush.msra.mxu0 %v671
      %1147 = vmatpush.msra.mxu0 %v667
      %1148 = vmatpush.msra.mxu0 %v663
      %1149 = vmatpush.msra.mxu0 %v659
      %1150 = vmatpush.msra.mxu0 %v655
      %1151 = vmatpush.msra.mxu0 %v651
      %1152 = vmatmul.f32.gmra.mxu0 %v935
      %v1153 = vpop.f32.mrf.mxu0
      %v1154 = vadd.f32 0.0, %v1153
      %1155 = vdwg.mxu0
      %1156 = vmatpush.msra.mxu0 %v712
      %1157 = vmatpush.msra.mxu0 %v708
      %1158 = vmatpush.msra.mxu0 %v704
      %1159 = vmatpush.msra.mxu0 %v700
      %1160 = vmatpush.msra.mxu0 %v696
      %1161 = vmatpush.msra.mxu0 %v692
      %1162 = vmatpush.msra.mxu0 %v688
      %1163 = vmatpush.msra.mxu0 %v684
      %1164 = vmatpush.msra.mxu0 %v680
      %1165 = vmatpush.msra.mxu0 %v676
      %1166 = vmatpush.msra.mxu0 %v672
      %1167 = vmatpush.msra.mxu0 %v668
      %1168 = vmatpush.msra.mxu0 %v664
      %1169 = vmatpush.msra.mxu0 %v660
      %1170 = vmatpush.msra.mxu0 %v656
      %1171 = vmatpush.msra.mxu0 %v652
      %1172 = vmatmul.f32.gmra.mxu0 %v935
      %v1173 = vpop.f32.mrf.mxu0
      %v1174 = vadd.f32 0.0, %v1173
      %1175 = vdwg.mxu0
      %v1180 = vrot.slane %v1134, 6
      %v1181 = vrot.slane %v1154, 4
      %v1182 = vrot.slane %v1174, 2
      %v1183 = vsel %vm872, %v1114, %v1180
      %v1184 = vsel %vm874, %v1181, %v1182
      %v1185 = vsel %vm876, %v1183, %v1184
      %v1187 = vadd.f32 %v1093, %v1185
      %v1188 = vadd.f32 %v1187, %v902
      %v1189 = vmul.f32 %v1188, 0.5
      %v1190 = vtanh.pop %v1189
      %v1191 = vmul.f32 %v1190, 0.5
      %v1192 = vadd.f32 %v1191, 0.5
      %v1194 = vrot.slane %v1188, 2
      %v1196 = vmul.f32 %v1194, 0.5
      %v1197 = vtanh.pop %v1196
      %v1198 = vmul.f32 %v1197, 0.5
      %v1199 = vadd.f32 %v1198, 0.5
      %v1200 = vrot.slane %v1188, 4
      %v1202 = vtanh.pop %v1200
      %v1203 = vrot.slane %v1188, 6
      %v1205 = vmul.f32 %v1203, 0.5
      %v1206 = vtanh.pop %v1205
      %v1207 = vmul.f32 %v1206, 0.5
      %v1208 = vadd.f32 %v1207, 0.5
      %v1209 = vmul.f32 %v1199, %v936
      %v1210 = vmul.f32 %v1192, %v1202
      %v1211 = vadd.f32 %v1209, %v1210
      %v1212 = vtanh.pop %v1211
      %v1213 = vmul.f32 %v1208, %v1212
      %1215 = vset.pattern.permute.xlu0 0
      %1216 = vperm.xlu0 %1215, %v1095
      %v1217 = vpop.permute.xlu0 %1216
      %v1219 = vmul.f32 %v1213, %v1217
      %v1220 = vmul.f32 %v1211, %v1217
      %s1221 = scalar_lea.vmem %s354, 2
      %1222 = vst [vmem:[%s1221] sm:$0x3] %v1219
      %s1223 = scalar_lea.vmem %s333, 16
      %v1224 = vld [vmem:[%s1223] sm:$0xff]
      %s1225 = scalar_lea.vmem %s347, 4
      %v1226 = vld [vmem:[%s1225] sm:$0x3]
      %1227 = vmatpush.msra.mxu0 %v774
      %1228 = vmatpush.msra.mxu0 %v770
      %1229 = vmatpush.msra.mxu0 %v766
      %1230 = vmatpush.msra.mxu0 %v762
      %1231 = vmatpush.msra.mxu0 %v758
      %1232 = vmatpush.msra.mxu0 %v754
      %1233 = vmatpush.msra.mxu0 %v750
      %1234 = vmatpush.msra.mxu0 %v746
      %1235 = vmatpush.msra.mxu0 %v742
      %1236 = vmatpush.msra.mxu0 %v738
      %1237 = vmatpush.msra.mxu0 %v734
      %1238 = vmatpush.msra.mxu0 %v730
      %1239 = vmatpush.msra.mxu0 %v726
      %1240 = vmatpush.msra.mxu0 %v722
      %1241 = vmatpush.msra.mxu0 %v718
      %1242 = vmatpush.msra.mxu0 %v714
      %1243 = vmatmul.f32.gmra.mxu0 %v1088
      %v1244 = vpop.f32.mrf.mxu0
      %v1245 = vadd.f32 0.0, %v1244
      %1246 = vdwg.mxu0
      %1247 = vmatpush.msra.mxu0 %v775
      %1248 = vmatpush.msra.mxu0 %v771
      %1249 = vmatpush.msra.mxu0 %v767
      %1250 = vmatpush.msra.mxu0 %v763
      %1251 = vmatpush.msra.mxu0 %v759
      %1252 = vmatpush.msra.mxu0 %v755
      %1253 = vmatpush.msra.mxu0 %v751
      %1254 = vmatpush.msra.mxu0 %v747
      %1255 = vmatpush.msra.mxu0 %v743
      %1256 = vmatpush.msra.mxu0 %v739
      %1257 = vmatpush.msra.mxu0 %v735
      %1258 = vmatpush.msra.mxu0 %v731
      %1259 = vmatpush.msra.mxu0 %v727
      %1260 = vmatpush.msra.mxu0 %v723
      %1261 = vmatpush.msra.mxu0 %v719
      %1262 = vmatpush.msra.mxu0 %v715
      %1263 = vmatmul.f32.gmra.mxu0 %v1088
      %v1264 = vpop.f32.mrf.mxu0
      %v1265 = vadd.f32 0.0, %v1264
      %1266 = vdwg.mxu0
      %1267 = vmatpush.msra.mxu0 %v776
      %1268 = vmatpush.msra.mxu0 %v772
      %1269 = vmatpush.msra.mxu0 %v768
      %1270 = vmatpush.msra.mxu0 %v764
      %1271 = vmatpush.msra.mxu0 %v760
      %1272 = vmatpush.msra.mxu0 %v756
      %1273 = vmatpush.msra.mxu0 %v752
      %1274 = vmatpush.msra.mxu0 %v748
      %1275 = vmatpush.msra.mxu0 %v744
      %1276 = vmatpush.msra.mxu0 %v740
      %1277 = vmatpush.msra.mxu0 %v736
      %1278 = vmatpush.msra.mxu0 %v732
      %1279 = vmatpush.msra.mxu0 %v728
      %1280 = vmatpush.msra.mxu0 %v724
      %1281 = vmatpush.msra.mxu0 %v720
      %1282 = vmatpush.msra.mxu0 %v716
      %1283 = vmatmul.f32.gmra.mxu0 %v1088
      %v1284 = vpop.f32.mrf.mxu0
      %v1285 = vadd.f32 0.0, %v1284
      %1286 = vdwg.mxu0
      %1287 = vmatpush.msra.mxu0 %v777
      %1288 = vmatpush.msra.mxu0 %v773
      %1289 = vmatpush.msra.mxu0 %v769
      %1290 = vmatpush.msra.mxu0 %v765
      %1291 = vmatpush.msra.mxu0 %v761
      %1292 = vmatpush.msra.mxu0 %v757
      %1293 = vmatpush.msra.mxu0 %v753
      %1294 = vmatpush.msra.mxu0 %v749
      %1295 = vmatpush.msra.mxu0 %v745
      %1296 = vmatpush.msra.mxu0 %v741
      %1297 = vmatpush.msra.mxu0 %v737
      %1298 = vmatpush.msra.mxu0 %v733
      %1299 = vmatpush.msra.mxu0 %v729
      %1300 = vmatpush.msra.mxu0 %v725
      %1301 = vmatpush.msra.mxu0 %v721
      %1302 = vmatpush.msra.mxu0 %v717
      %1303 = vmatmul.f32.gmra.mxu0 %v1088
      %v1304 = vpop.f32.mrf.mxu0
      %v1305 = vadd.f32 0.0, %v1304
      %1306 = vdwg.mxu0
      %v1311 = vrot.slane %v1265, 6
      %v1312 = vrot.slane %v1285, 4
      %v1313 = vrot.slane %v1305, 2
      %v1314 = vsel %vm872, %v1245, %v1311
      %v1315 = vsel %vm874, %v1312, %v1313
      %v1316 = vsel %vm876, %v1314, %v1315
      %v1318 = vadd.f32 %v1224, %v1316
      %v1319 = vadd.f32 %v1318, %v1055
      %v1320 = vmul.f32 %v1319, 0.5
      %v1321 = vtanh.pop %v1320
      %v1322 = vmul.f32 %v1321, 0.5
      %v1323 = vadd.f32 %v1322, 0.5
      %v1325 = vrot.slane %v1319, 2
      %v1327 = vmul.f32 %v1325, 0.5
      %v1328 = vtanh.pop %v1327
      %v1329 = vmul.f32 %v1328, 0.5
      %v1330 = vadd.f32 %v1329, 0.5
      %v1331 = vrot.slane %v1319, 4
      %v1333 = vtanh.pop %v1331
      %v1334 = vrot.slane %v1319, 6
      %v1336 = vmul.f32 %v1334, 0.5
      %v1337 = vtanh.pop %v1336
      %v1338 = vmul.f32 %v1337, 0.5
      %v1339 = vadd.f32 %v1338, 0.5
      %v1340 = vmul.f32 %v1330, %v1089
      %v1341 = vmul.f32 %v1323, %v1333
      %v1342 = vadd.f32 %v1340, %v1341
      %v1343 = vtanh.pop %v1342
      %v1344 = vmul.f32 %v1339, %v1343
      %1346 = vset.pattern.permute.xlu0 0
      %1347 = vperm.xlu0 %1346, %v1226
      %v1348 = vpop.permute.xlu0 %1347
      %v1350 = vmul.f32 %v1344, %v1348
      %v1351 = vmul.f32 %v1342, %v1348
      %s1352 = scalar_lea.vmem %s361, 4
      %1353 = vst [vmem:[%s1352] sm:$0x3] %v1350
      %s1354 = scalar_lea.vmem %s324, 16
      %v1355 = vld [vmem:[%s1354] sm:$0xff]
      %s1356 = scalar_lea.vmem %s340, 4
      %v1357 = vld [vmem:[%s1356] sm:$0x3]
      %1358 = vmatpush.msra.mxu0 %v709
      %1359 = vmatpush.msra.mxu0 %v705
      %1360 = vmatpush.msra.mxu0 %v701
      %1361 = vmatpush.msra.mxu0 %v697
      %1362 = vmatpush.msra.mxu0 %v693
      %1363 = vmatpush.msra.mxu0 %v689
      %1364 = vmatpush.msra.mxu0 %v685
      %1365 = vmatpush.msra.mxu0 %v681
      %1366 = vmatpush.msra.mxu0 %v677
      %1367 = vmatpush.msra.mxu0 %v673
      %1368 = vmatpush.msra.mxu0 %v669
      %1369 = vmatpush.msra.mxu0 %v665
      %1370 = vmatpush.msra.mxu0 %v661
      %1371 = vmatpush.msra.mxu0 %v657
      %1372 = vmatpush.msra.mxu0 %v653
      %1373 = vmatpush.msra.mxu0 %v649
      %1374 = vmatmul.f32.gmra.mxu0 %v1219
      %v1375 = vpop.f32.mrf.mxu0
      %v1376 = vadd.f32 0.0, %v1375
      %1377 = vdwg.mxu0
      %1378 = vmatpush.msra.mxu0 %v710
      %1379 = vmatpush.msra.mxu0 %v706
      %1380 = vmatpush.msra.mxu0 %v702
      %1381 = vmatpush.msra.mxu0 %v698
      %1382 = vmatpush.msra.mxu0 %v694
      %1383 = vmatpush.msra.mxu0 %v690
      %1384 = vmatpush.msra.mxu0 %v686
      %1385 = vmatpush.msra.mxu0 %v682
      %1386 = vmatpush.msra.mxu0 %v678
      %1387 = vmatpush.msra.mxu0 %v674
      %1388 = vmatpush.msra.mxu0 %v670
      %1389 = vmatpush.msra.mxu0 %v666
      %1390 = vmatpush.msra.mxu0 %v662
      %1391 = vmatpush.msra.mxu0 %v658
      %1392 = vmatpush.msra.mxu0 %v654
      %1393 = vmatpush.msra.mxu0 %v650
      %1394 = vmatmul.f32.gmra.mxu0 %v1219
      %v1395 = vpop.f32.mrf.mxu0
      %v1396 = vadd.f32 0.0, %v1395
      %1397 = vdwg.mxu0
      %1398 = vmatpush.msra.mxu0 %v711
      %1399 = vmatpush.msra.mxu0 %v707
      %1400 = vmatpush.msra.mxu0 %v703
      %1401 = vmatpush.msra.mxu0 %v699
      %1402 = vmatpush.msra.mxu0 %v695
      %1403 = vmatpush.msra.mxu0 %v691
      %1404 = vmatpush.msra.mxu0 %v687
      %1405 = vmatpush.msra.mxu0 %v683
      %1406 = vmatpush.msra.mxu0 %v679
      %1407 = vmatpush.msra.mxu0 %v675
      %1408 = vmatpush.msra.mxu0 %v671
      %1409 = vmatpush.msra.mxu0 %v667
      %1410 = vmatpush.msra.mxu0 %v663
      %1411 = vmatpush.msra.mxu0 %v659
      %1412 = vmatpush.msra.mxu0 %v655
      %1413 = vmatpush.msra.mxu0 %v651
      %1414 = vmatmul.f32.gmra.mxu0 %v1219
      %v1415 = vpop.f32.mrf.mxu0
      %v1416 = vadd.f32 0.0, %v1415
      %1417 = vdwg.mxu0
      %1418 = vmatpush.msra.mxu0 %v712
      %1419 = vmatpush.msra.mxu0 %v708
      %1420 = vmatpush.msra.mxu0 %v704
      %1421 = vmatpush.msra.mxu0 %v700
      %1422 = vmatpush.msra.mxu0 %v696
      %1423 = vmatpush.msra.mxu0 %v692
      %1424 = vmatpush.msra.mxu0 %v688
      %1425 = vmatpush.msra.mxu0 %v684
      %1426 = vmatpush.msra.mxu0 %v680
      %1427 = vmatpush.msra.mxu0 %v676
      %1428 = vmatpush.msra.mxu0 %v672
      %1429 = vmatpush.msra.mxu0 %v668
      %1430 = vmatpush.msra.mxu0 %v664
      %1431 = vmatpush.msra.mxu0 %v660
      %1432 = vmatpush.msra.mxu0 %v656
      %1433 = vmatpush.msra.mxu0 %v652
      %1434 = vmatmul.f32.gmra.mxu0 %v1219
      %v1435 = vpop.f32.mrf.mxu0
      %v1436 = vadd.f32 0.0, %v1435
      %1437 = vdwg.mxu0
      %v1442 = vrot.slane %v1396, 6
      %v1443 = vrot.slane %v1416, 4
      %v1444 = vrot.slane %v1436, 2
      %v1445 = vsel %vm872, %v1376, %v1442
      %v1446 = vsel %vm874, %v1443, %v1444
      %v1447 = vsel %vm876, %v1445, %v1446
      %v1449 = vadd.f32 %v1355, %v1447
      %v1450 = vadd.f32 %v1449, %v902
      %v1451 = vmul.f32 %v1450, 0.5
      %v1452 = vtanh.pop %v1451
      %v1453 = vmul.f32 %v1452, 0.5
      %v1454 = vadd.f32 %v1453, 0.5
      %v1456 = vrot.slane %v1450, 2
      %v1458 = vmul.f32 %v1456, 0.5
      %v1459 = vtanh.pop %v1458
      %v1460 = vmul.f32 %v1459, 0.5
      %v1461 = vadd.f32 %v1460, 0.5
      %v1462 = vrot.slane %v1450, 4
      %v1464 = vtanh.pop %v1462
      %v1465 = vrot.slane %v1450, 6
      %v1467 = vmul.f32 %v1465, 0.5
      %v1468 = vtanh.pop %v1467
      %v1469 = vmul.f32 %v1468, 0.5
      %v1470 = vadd.f32 %v1469, 0.5
      %v1471 = vmul.f32 %v1461, %v1220
      %v1472 = vmul.f32 %v1454, %v1464
      %v1473 = vadd.f32 %v1471, %v1472
      %v1474 = vtanh.pop %v1473
      %v1475 = vmul.f32 %v1470, %v1474
      %1477 = vset.pattern.permute.xlu0 0
      %1478 = vperm.xlu0 %1477, %v1357
      %v1479 = vpop.permute.xlu0 %1478
      %v1481 = vmul.f32 %v1475, %v1479
      %v1482 = vmul.f32 %v1473, %v1479
      %s1483 = scalar_lea.vmem %s354, 4
      %1484 = vst [vmem:[%s1483] sm:$0x3] %v1481
      %s1485 = scalar_lea.vmem %s333, 8
      %v1486 = vld [vmem:[%s1485] sm:$0xff]
      %s1487 = scalar_lea.vmem %s347, 2
      %v1488 = vld [vmem:[%s1487] sm:$0x3]
      %1489 = vmatpush.msra.mxu0 %v774
      %1490 = vmatpush.msra.mxu0 %v770
      %1491 = vmatpush.msra.mxu0 %v766
      %1492 = vmatpush.msra.mxu0 %v762
      %1493 = vmatpush.msra.mxu0 %v758
      %1494 = vmatpush.msra.mxu0 %v754
      %1495 = vmatpush.msra.mxu0 %v750
      %1496 = vmatpush.msra.mxu0 %v746
      %1497 = vmatpush.msra.mxu0 %v742
      %1498 = vmatpush.msra.mxu0 %v738
      %1499 = vmatpush.msra.mxu0 %v734
      %1500 = vmatpush.msra.mxu0 %v730
      %1501 = vmatpush.msra.mxu0 %v726
      %1502 = vmatpush.msra.mxu0 %v722
      %1503 = vmatpush.msra.mxu0 %v718
      %1504 = vmatpush.msra.mxu0 %v714
      %1505 = vmatmul.f32.gmra.mxu0 %v1350
      %v1506 = vpop.f32.mrf.mxu0
      %v1507 = vadd.f32 0.0, %v1506
      %1508 = vdwg.mxu0
      %1509 = vmatpush.msra.mxu0 %v775
      %1510 = vmatpush.msra.mxu0 %v771
      %1511 = vmatpush.msra.mxu0 %v767
      %1512 = vmatpush.msra.mxu0 %v763
      %1513 = vmatpush.msra.mxu0 %v759
      %1514 = vmatpush.msra.mxu0 %v755
      %1515 = vmatpush.msra.mxu0 %v751
      %1516 = vmatpush.msra.mxu0 %v747
      %1517 = vmatpush.msra.mxu0 %v743
      %1518 = vmatpush.msra.mxu0 %v739
      %1519 = vmatpush.msra.mxu0 %v735
      %1520 = vmatpush.msra.mxu0 %v731
      %1521 = vmatpush.msra.mxu0 %v727
      %1522 = vmatpush.msra.mxu0 %v723
      %1523 = vmatpush.msra.mxu0 %v719
      %1524 = vmatpush.msra.mxu0 %v715
      %1525 = vmatmul.f32.gmra.mxu0 %v1350
      %v1526 = vpop.f32.mrf.mxu0
      %v1527 = vadd.f32 0.0, %v1526
      %1528 = vdwg.mxu0
      %1529 = vmatpush.msra.mxu0 %v776
      %1530 = vmatpush.msra.mxu0 %v772
      %1531 = vmatpush.msra.mxu0 %v768
      %1532 = vmatpush.msra.mxu0 %v764
      %1533 = vmatpush.msra.mxu0 %v760
      %1534 = vmatpush.msra.mxu0 %v756
      %1535 = vmatpush.msra.mxu0 %v752
      %1536 = vmatpush.msra.mxu0 %v748
      %1537 = vmatpush.msra.mxu0 %v744
      %1538 = vmatpush.msra.mxu0 %v740
      %1539 = vmatpush.msra.mxu0 %v736
      %1540 = vmatpush.msra.mxu0 %v732
      %1541 = vmatpush.msra.mxu0 %v728
      %1542 = vmatpush.msra.mxu0 %v724
      %1543 = vmatpush.msra.mxu0 %v720
      %1544 = vmatpush.msra.mxu0 %v716
      %1545 = vmatmul.f32.gmra.mxu0 %v1350
      %v1546 = vpop.f32.mrf.mxu0
      %v1547 = vadd.f32 0.0, %v1546
      %1548 = vdwg.mxu0
      %1549 = vmatpush.msra.mxu0 %v777
      %1550 = vmatpush.msra.mxu0 %v773
      %1551 = vmatpush.msra.mxu0 %v769
      %1552 = vmatpush.msra.mxu0 %v765
      %1553 = vmatpush.msra.mxu0 %v761
      %1554 = vmatpush.msra.mxu0 %v757
      %1555 = vmatpush.msra.mxu0 %v753
      %1556 = vmatpush.msra.mxu0 %v749
      %1557 = vmatpush.msra.mxu0 %v745
      %1558 = vmatpush.msra.mxu0 %v741
      %1559 = vmatpush.msra.mxu0 %v737
      %1560 = vmatpush.msra.mxu0 %v733
      %1561 = vmatpush.msra.mxu0 %v729
      %1562 = vmatpush.msra.mxu0 %v725
      %1563 = vmatpush.msra.mxu0 %v721
      %1564 = vmatpush.msra.mxu0 %v717
      %1565 = vmatmul.f32.gmra.mxu0 %v1350
      %v1566 = vpop.f32.mrf.mxu0
      %v1567 = vadd.f32 0.0, %v1566
      %1568 = vdwg.mxu0
      %v1573 = vrot.slane %v1527, 6
      %v1574 = vrot.slane %v1547, 4
      %v1575 = vrot.slane %v1567, 2
      %v1576 = vsel %vm872, %v1507, %v1573
      %v1577 = vsel %vm874, %v1574, %v1575
      %v1578 = vsel %vm876, %v1576, %v1577
      %v1580 = vadd.f32 %v1486, %v1578
      %v1581 = vadd.f32 %v1580, %v1055
      %v1582 = vmul.f32 %v1581, 0.5
      %v1583 = vtanh.pop %v1582
      %v1584 = vmul.f32 %v1583, 0.5
      %v1585 = vadd.f32 %v1584, 0.5
      %v1587 = vrot.slane %v1581, 2
      %v1589 = vmul.f32 %v1587, 0.5
      %v1590 = vtanh.pop %v1589
      %v1591 = vmul.f32 %v1590, 0.5
      %v1592 = vadd.f32 %v1591, 0.5
      %v1593 = vrot.slane %v1581, 4
      %v1595 = vtanh.pop %v1593
      %v1596 = vrot.slane %v1581, 6
      %v1598 = vmul.f32 %v1596, 0.5
      %v1599 = vtanh.pop %v1598
      %v1600 = vmul.f32 %v1599, 0.5
      %v1601 = vadd.f32 %v1600, 0.5
      %v1602 = vmul.f32 %v1592, %v1351
      %v1603 = vmul.f32 %v1585, %v1595
      %v1604 = vadd.f32 %v1602, %v1603
      %v1605 = vtanh.pop %v1604
      %v1606 = vmul.f32 %v1601, %v1605
      %1608 = vset.pattern.permute.xlu0 0
      %1609 = vperm.xlu0 %1608, %v1488
      %v1610 = vpop.permute.xlu0 %1609
      %v1612 = vmul.f32 %v1606, %v1610
      %v1613 = vmul.f32 %v1604, %v1610
      %s1614 = scalar_lea.vmem %s361, 2
      %1615 = vst [vmem:[%s1614] sm:$0x3] %v1612
      %s1616 = scalar_lea.vmem %s324, 24
      %v1617 = vld [vmem:[%s1616] sm:$0xff]
      %s1618 = scalar_lea.vmem %s340, 6
      %v1619 = vld [vmem:[%s1618] sm:$0x3]
      %1620 = vmatpush.msra.mxu0 %v709
      %1621 = vmatpush.msra.mxu0 %v705
      %1622 = vmatpush.msra.mxu0 %v701
      %1623 = vmatpush.msra.mxu0 %v697
      %1624 = vmatpush.msra.mxu0 %v693
      %1625 = vmatpush.msra.mxu0 %v689
      %1626 = vmatpush.msra.mxu0 %v685
      %1627 = vmatpush.msra.mxu0 %v681
      %1628 = vmatpush.msra.mxu0 %v677
      %1629 = vmatpush.msra.mxu0 %v673
      %1630 = vmatpush.msra.mxu0 %v669
      %1631 = vmatpush.msra.mxu0 %v665
      %1632 = vmatpush.msra.mxu0 %v661
      %1633 = vmatpush.msra.mxu0 %v657
      %1634 = vmatpush.msra.mxu0 %v653
      %1635 = vmatpush.msra.mxu0 %v649
      %1636 = vmatmul.f32.gmra.mxu0 %v1481
      %v1637 = vpop.f32.mrf.mxu0
      %v1638 = vadd.f32 0.0, %v1637
      %1639 = vdwg.mxu0
      %1640 = vmatpush.msra.mxu0 %v710
      %1641 = vmatpush.msra.mxu0 %v706
      %1642 = vmatpush.msra.mxu0 %v702
      %1643 = vmatpush.msra.mxu0 %v698
      %1644 = vmatpush.msra.mxu0 %v694
      %1645 = vmatpush.msra.mxu0 %v690
      %1646 = vmatpush.msra.mxu0 %v686
      %1647 = vmatpush.msra.mxu0 %v682
      %1648 = vmatpush.msra.mxu0 %v678
      %1649 = vmatpush.msra.mxu0 %v674
      %1650 = vmatpush.msra.mxu0 %v670
      %1651 = vmatpush.msra.mxu0 %v666
      %1652 = vmatpush.msra.mxu0 %v662
      %1653 = vmatpush.msra.mxu0 %v658
      %1654 = vmatpush.msra.mxu0 %v654
      %1655 = vmatpush.msra.mxu0 %v650
      %1656 = vmatmul.f32.gmra.mxu0 %v1481
      %v1657 = vpop.f32.mrf.mxu0
      %v1658 = vadd.f32 0.0, %v1657
      %1659 = vdwg.mxu0
      %1660 = vmatpush.msra.mxu0 %v711
      %1661 = vmatpush.msra.mxu0 %v707
      %1662 = vmatpush.msra.mxu0 %v703
      %1663 = vmatpush.msra.mxu0 %v699
      %1664 = vmatpush.msra.mxu0 %v695
      %1665 = vmatpush.msra.mxu0 %v691
      %1666 = vmatpush.msra.mxu0 %v687
      %1667 = vmatpush.msra.mxu0 %v683
      %1668 = vmatpush.msra.mxu0 %v679
      %1669 = vmatpush.msra.mxu0 %v675
      %1670 = vmatpush.msra.mxu0 %v671
      %1671 = vmatpush.msra.mxu0 %v667
      %1672 = vmatpush.msra.mxu0 %v663
      %1673 = vmatpush.msra.mxu0 %v659
      %1674 = vmatpush.msra.mxu0 %v655
      %1675 = vmatpush.msra.mxu0 %v651
      %1676 = vmatmul.f32.gmra.mxu0 %v1481
      %v1677 = vpop.f32.mrf.mxu0
      %v1678 = vadd.f32 0.0, %v1677
      %1679 = vdwg.mxu0
      %1680 = vmatpush.msra.mxu0 %v712
      %1681 = vmatpush.msra.mxu0 %v708
      %1682 = vmatpush.msra.mxu0 %v704
      %1683 = vmatpush.msra.mxu0 %v700
      %1684 = vmatpush.msra.mxu0 %v696
      %1685 = vmatpush.msra.mxu0 %v692
      %1686 = vmatpush.msra.mxu0 %v688
      %1687 = vmatpush.msra.mxu0 %v684
      %1688 = vmatpush.msra.mxu0 %v680
      %1689 = vmatpush.msra.mxu0 %v676
      %1690 = vmatpush.msra.mxu0 %v672
      %1691 = vmatpush.msra.mxu0 %v668
      %1692 = vmatpush.msra.mxu0 %v664
      %1693 = vmatpush.msra.mxu0 %v660
      %1694 = vmatpush.msra.mxu0 %v656
      %1695 = vmatpush.msra.mxu0 %v652
      %1696 = vmatmul.f32.gmra.mxu0 %v1481
      %v1697 = vpop.f32.mrf.mxu0
      %v1698 = vadd.f32 0.0, %v1697
      %1699 = vdwg.mxu0
      %v1704 = vrot.slane %v1658, 6
      %v1705 = vrot.slane %v1678, 4
      %v1706 = vrot.slane %v1698, 2
      %v1707 = vsel %vm872, %v1638, %v1704
      %v1708 = vsel %vm874, %v1705, %v1706
      %v1709 = vsel %vm876, %v1707, %v1708
      %v1711 = vadd.f32 %v1617, %v1709
      %v1712 = vadd.f32 %v1711, %v902
      %v1713 = vmul.f32 %v1712, 0.5
      %v1714 = vtanh.pop %v1713
      %v1715 = vmul.f32 %v1714, 0.5
      %v1716 = vadd.f32 %v1715, 0.5
      %v1718 = vrot.slane %v1712, 2
      %v1720 = vmul.f32 %v1718, 0.5
      %v1721 = vtanh.pop %v1720
      %v1722 = vmul.f32 %v1721, 0.5
      %v1723 = vadd.f32 %v1722, 0.5
      %v1724 = vrot.slane %v1712, 4
      %v1726 = vtanh.pop %v1724
      %v1727 = vrot.slane %v1712, 6
      %v1729 = vmul.f32 %v1727, 0.5
      %v1730 = vtanh.pop %v1729
      %v1731 = vmul.f32 %v1730, 0.5
      %v1732 = vadd.f32 %v1731, 0.5
      %v1733 = vmul.f32 %v1723, %v1482
      %v1734 = vmul.f32 %v1716, %v1726
      %v1735 = vadd.f32 %v1733, %v1734
      %v1736 = vtanh.pop %v1735
      %v1737 = vmul.f32 %v1732, %v1736
      %1739 = vset.pattern.permute.xlu0 0
      %1740 = vperm.xlu0 %1739, %v1619
      %v1741 = vpop.permute.xlu0 %1740
      %v1743 = vmul.f32 %v1737, %v1741
      %v1744 = vmul.f32 %v1735, %v1741
      %s1745 = scalar_lea.vmem %s354, 6
      %1746 = vst [vmem:[%s1745] sm:$0x3] %v1743
      %v1747 = vld [vmem:[%s333] sm:$0xff]
      %v1748 = vld [vmem:[%s347] sm:$0x3]
      %1749 = vmatpush.msra.mxu0 %v774
      %1750 = vmatpush.msra.mxu0 %v770
      %1751 = vmatpush.msra.mxu0 %v766
      %1752 = vmatpush.msra.mxu0 %v762
      %1753 = vmatpush.msra.mxu0 %v758
      %1754 = vmatpush.msra.mxu0 %v754
      %1755 = vmatpush.msra.mxu0 %v750
      %1756 = vmatpush.msra.mxu0 %v746
      %1757 = vmatpush.msra.mxu0 %v742
      %1758 = vmatpush.msra.mxu0 %v738
      %1759 = vmatpush.msra.mxu0 %v734
      %1760 = vmatpush.msra.mxu0 %v730
      %1761 = vmatpush.msra.mxu0 %v726
      %1762 = vmatpush.msra.mxu0 %v722
      %1763 = vmatpush.msra.mxu0 %v718
      %1764 = vmatpush.msra.mxu0 %v714
      %1765 = vmatmul.f32.gmra.mxu0 %v1612
      %v1766 = vpop.f32.mrf.mxu0
      %v1767 = vadd.f32 0.0, %v1766
      %1768 = vdwg.mxu0
      %1769 = vmatpush.msra.mxu0 %v775
      %1770 = vmatpush.msra.mxu0 %v771
      %1771 = vmatpush.msra.mxu0 %v767
      %1772 = vmatpush.msra.mxu0 %v763
      %1773 = vmatpush.msra.mxu0 %v759
      %1774 = vmatpush.msra.mxu0 %v755
      %1775 = vmatpush.msra.mxu0 %v751
      %1776 = vmatpush.msra.mxu0 %v747
      %1777 = vmatpush.msra.mxu0 %v743
      %1778 = vmatpush.msra.mxu0 %v739
      %1779 = vmatpush.msra.mxu0 %v735
      %1780 = vmatpush.msra.mxu0 %v731
      %1781 = vmatpush.msra.mxu0 %v727
      %1782 = vmatpush.msra.mxu0 %v723
      %1783 = vmatpush.msra.mxu0 %v719
      %1784 = vmatpush.msra.mxu0 %v715
      %1785 = vmatmul.f32.gmra.mxu0 %v1612
      %v1786 = vpop.f32.mrf.mxu0
      %v1787 = vadd.f32 0.0, %v1786
      %1788 = vdwg.mxu0
      %1789 = vmatpush.msra.mxu0 %v776
      %1790 = vmatpush.msra.mxu0 %v772
      %1791 = vmatpush.msra.mxu0 %v768
      %1792 = vmatpush.msra.mxu0 %v764
      %1793 = vmatpush.msra.mxu0 %v760
      %1794 = vmatpush.msra.mxu0 %v756
      %1795 = vmatpush.msra.mxu0 %v752
      %1796 = vmatpush.msra.mxu0 %v748
      %1797 = vmatpush.msra.mxu0 %v744
      %1798 = vmatpush.msra.mxu0 %v740
      %1799 = vmatpush.msra.mxu0 %v736
      %1800 = vmatpush.msra.mxu0 %v732
      %1801 = vmatpush.msra.mxu0 %v728
      %1802 = vmatpush.msra.mxu0 %v724
      %1803 = vmatpush.msra.mxu0 %v720
      %1804 = vmatpush.msra.mxu0 %v716
      %1805 = vmatmul.f32.gmra.mxu0 %v1612
      %v1806 = vpop.f32.mrf.mxu0
      %v1807 = vadd.f32 0.0, %v1806
      %1808 = vdwg.mxu0
      %1809 = vmatpush.msra.mxu0 %v777
      %1810 = vmatpush.msra.mxu0 %v773
      %1811 = vmatpush.msra.mxu0 %v769
      %1812 = vmatpush.msra.mxu0 %v765
      %1813 = vmatpush.msra.mxu0 %v761
      %1814 = vmatpush.msra.mxu0 %v757
      %1815 = vmatpush.msra.mxu0 %v753
      %1816 = vmatpush.msra.mxu0 %v749
      %1817 = vmatpush.msra.mxu0 %v745
      %1818 = vmatpush.msra.mxu0 %v741
      %1819 = vmatpush.msra.mxu0 %v737
      %1820 = vmatpush.msra.mxu0 %v733
      %1821 = vmatpush.msra.mxu0 %v729
      %1822 = vmatpush.msra.mxu0 %v725
      %1823 = vmatpush.msra.mxu0 %v721
      %1824 = vmatpush.msra.mxu0 %v717
      %1825 = vmatmul.f32.gmra.mxu0 %v1612
      %v1826 = vpop.f32.mrf.mxu0
      %v1827 = vadd.f32 0.0, %v1826
      %1828 = vdwg.mxu0
      %v1833 = vrot.slane %v1787, 6
      %v1834 = vrot.slane %v1807, 4
      %v1835 = vrot.slane %v1827, 2
      %v1836 = vsel %vm872, %v1767, %v1833
      %v1837 = vsel %vm874, %v1834, %v1835
      %v1838 = vsel %vm876, %v1836, %v1837
      %v1840 = vadd.f32 %v1747, %v1838
      %v1841 = vadd.f32 %v1840, %v1055
      %v1842 = vmul.f32 %v1841, 0.5
      %v1843 = vtanh.pop %v1842
      %v1844 = vmul.f32 %v1843, 0.5
      %v1845 = vadd.f32 %v1844, 0.5
      %v1847 = vrot.slane %v1841, 2
      %v1849 = vmul.f32 %v1847, 0.5
      %v1850 = vtanh.pop %v1849
      %v1851 = vmul.f32 %v1850, 0.5
      %v1852 = vadd.f32 %v1851, 0.5
      %v1853 = vrot.slane %v1841, 4
      %v1855 = vtanh.pop %v1853
      %v1856 = vrot.slane %v1841, 6
      %v1858 = vmul.f32 %v1856, 0.5
      %v1859 = vtanh.pop %v1858
      %v1860 = vmul.f32 %v1859, 0.5
      %v1861 = vadd.f32 %v1860, 0.5
      %v1862 = vmul.f32 %v1852, %v1613
      %v1863 = vmul.f32 %v1845, %v1855
      %v1864 = vadd.f32 %v1862, %v1863
      %v1865 = vtanh.pop %v1864
      %v1866 = vmul.f32 %v1861, %v1865
      %1868 = vset.pattern.permute.xlu0 0
      %1869 = vperm.xlu0 %1868, %v1748
      %v1870 = vpop.permute.xlu0 %1869
      %v1872 = vmul.f32 %v1866, %v1870
      %v1873 = vmul.f32 %v1864, %v1870
      %1874 = vst [vmem:[%s361] sm:$0x3] %v1872
      %1875 = vst [vmem:[#allocation3] sm:$0x3] %v1743
      %1876 = vst [vmem:[#allocation4] sm:$0x3] %v1744
      %1877 = vst [vmem:[#allocation5] sm:$0x3] %v1872
      %1878 = vst [vmem:[#allocation6] sm:$0x3] %v1873
      %s1879 = smul.u32 4, %s19
      %p1880 = scmp.lt.s32.totalorder %s1879, 11
      %s1881 = scalar_select %p1880, %s1879, 11
      %s1882 = smul.addr %s1881, 2
      %s1883 = scalar_lea.vmem %s6, %s1882
      %s1884 = ssub.s32 2, %s19
      %s1885 = smul.u32 4, %s1884
      %p1886 = scmp.lt.s32.totalorder %s1885, 11
      %s1887 = scalar_select %p1886, %s1885, 11
      %s1888 = smul.addr %s1887, 2
      %s1889 = scalar_lea.vmem %s7, %s1888
      // Predicated region
      $region65: #{encoder_forward.2} parent=39 // pred_check
        %p1890 = pneg %p166
      $region66: #{encoder_forward.2} parent=39 // pred_check_branch
        %1892 = sbr.rel (%p1890) target = $region68
      $region67: #{encoder_forward.2} parent=39 // pred_region
        %s1893 = smul.u32 4, %s19
      $region68: #{encoder_forward.2} parent=39 // pred_fallthru
        _
      // Predicated region
      $region69: #{encoder_forward.2} parent=39 // pred_check
        %p1894 = pneg %p194
      $region70: #{encoder_forward.2} parent=39 // pred_check_branch
        %1896 = sbr.rel (%p1894) target = $region72
      $region71: #{encoder_forward.2} parent=39 // pred_region
        %s1897 = ssub.s32 2, %s19
        %s1898 = smul.u32 4, %s1897
      $region72: #{encoder_forward.2} parent=39 // pred_fallthru
        _
    $region40: #{encoder_forward.2} parent=5 // pred_fallthru
      _
    %p1899 = scmp.le.s32.totalorder 2, %s14
    // Predicated region
    $region73: #{encoder_forward.2} parent=5 // pred_check
      %p1900 = pneg %p1899
    $region74: #{encoder_forward.2} parent=5 // pred_check_branch
      %1902 = sbr.rel (%p1900) target = $region76
    $region75: #{encoder_forward.2} parent=5 // pred_region
      %s1903 = ssub.s32 %s14, 2
      // Predicated region
      $region77: #{encoder_forward.2} parent=75 // pred_check
        %p1904 = pneg %p172
      $region78: #{encoder_forward.2} parent=75 // pred_check_branch
        %1906 = sbr.rel (%p1904) target = $region80
      $region79: #{encoder_forward.2} parent=75 // pred_region
        %s1907 = smul.u32 4, %s20
        %p1908 = scmp.lt.s32.totalorder %s1907, 11
        %s1909 = scalar_select %p1908, %s1907, 11
        %s1910 = smul.addr %s1909, 2
        %s1911 = scalar_lea.vmem %s6, %s1910
      $region80: #{encoder_forward.2} parent=75 // pred_fallthru
        _
      // Predicated region
      $region81: #{encoder_forward.2} parent=75 // pred_check
        %p1912 = pneg %p200
      $region82: #{encoder_forward.2} parent=75 // pred_check_branch
        %1914 = sbr.rel (%p1912) target = $region84
      $region83: #{encoder_forward.2} parent=75 // pred_region
        %s1915 = ssub.s32 2, %s20
        %s1916 = smul.u32 4, %s1915
        %p1917 = scmp.lt.s32.totalorder %s1916, 11
        %s1918 = scalar_select %p1917, %s1916, 11
        %s1919 = smul.addr %s1918, 2
        %s1920 = scalar_lea.vmem %s7, %s1919
      $region84: #{encoder_forward.2} parent=75 // pred_fallthru
        _
    $region76: #{encoder_forward.2} parent=5 // pred_fallthru
      _
  $region6: #{encoder_forward.2} parent=0 // loop_footer
    %s18 = sadd.s32 1, %s14
  $region7: #{encoder_forward.2} parent=0 // loop_footer_branch
    %13 = sbr.rel target = $region3
  $region8: #{encoder_forward.2} parent=0 // loop_exit
    _

</llo_original>
